<compile_context>
chip_gen: v5e
topology: v5e:2x2
jax: 0.10.0
libtpu: 0.0.40
codegen_flags: <defaults>
</compile_context>

<pallas_src>
import jax
import jax.numpy as jnp
from jax import lax
from jax.experimental import pallas as pl
from jax.experimental.pallas import tpu as pltpu


def mf_kernel(u_idx_ref, i_idx_ref, u_tab_ref, i_tab_ref, out_ref):
    """One grid step = one tile of BT (user, item) pairs.

    u_idx_ref / i_idx_ref : (1, BT) int32 index tiles in VMEM.
    u_tab_ref / i_tab_ref : (D, n_users) / (D, n_items) transposed embedding
                            tables, fully resident in VMEM (constant index_map).
    out_ref               : (1, BT) lane-dense tile of per-example dot products.
    """
    u_ids = u_idx_ref[...]                       # (1, BT) int32
    i_ids = i_idx_ref[...]                       # (1, BT) int32
    n_users = u_tab_ref.shape[1]
    n_items = i_tab_ref.shape[1]
    bt = u_ids.shape[1]

    # One-hot selection matrices: rows = table entries, columns = batch lanes.
    u_sel = lax.broadcasted_iota(jnp.int32, (n_users, bt), 0) == u_ids
    i_sel = lax.broadcasted_iota(jnp.int32, (n_items, bt), 0) == i_ids

    # Gather on the MXU: (D, n_rows) @ (n_rows, BT) -> (D, BT); batch stays on
    # lanes, accumulate in f32.  HIGHEST precision keeps the one-hot selection
    # numerically exact for f32 tables.
    u_rows = jnp.dot(u_tab_ref[...], u_sel.astype(u_tab_ref.dtype),
                     preferred_element_type=jnp.float32,
                     precision=lax.Precision.HIGHEST)
    i_rows = jnp.dot(i_tab_ref[...], i_sel.astype(i_tab_ref.dtype),
                     preferred_element_type=jnp.float32,
                     precision=lax.Precision.HIGHEST)

    # VPU multiply + XLU sublane reduce over the latent dim -> (1, BT).
    out_ref[...] = jnp.sum(u_rows * i_rows, axis=0, keepdims=True)


def mf_forward(u_emb, i_emb, u_idx, i_idx, *, block_batch=256):
    """Pallas implementation of MF.forward(u, i) -> (batch,) float32."""
    B = u_idx.shape[0]
    n_users, D = u_emb.shape
    n_items, _ = i_emb.shape

    BT = block_batch                       # lane-dense tile: multiple of 128
    G = pl.cdiv(B, BT)
    Bp = G * BT

    # Pad indices to a whole number of tiles (pad rows are valid index 0 and
    # their outputs are sliced away below).
    u_idx_p = jnp.pad(u_idx.astype(jnp.int32), (0, Bp - B)).reshape(G, BT)
    i_idx_p = jnp.pad(i_idx.astype(jnp.int32), (0, Bp - B)).reshape(G, BT)

    # Transposed tables: latent dim on sublanes, rows on lanes (layout
    # plumbing in the wrapper so the kernel output is lane-dense).
    u_tab_t = u_emb.T                      # (D, n_users)
    i_tab_t = i_emb.T                      # (D, n_items)

    # Explicit VMEM budget: resident tables + generous activation margin.
    table_bytes = (u_emb.size + i_emb.size) * u_emb.dtype.itemsize
    vmem_limit = int(min(2 * table_bytes + (32 << 20), 100 << 20))
    # TODO(synk): for tables too large to keep resident in VMEM (> ~48 MiB on
    # v7x's 64 MiB), switch to a manual per-row DMA gather path instead.

    out = pl.pallas_call(
        mf_kernel,
        out_shape=jax.ShapeDtypeStruct((G, BT), jnp.float32),
        grid=(G,),
        in_specs=[
            pl.BlockSpec((1, BT), lambda g: (g, 0)),        # user index tile
            pl.BlockSpec((1, BT), lambda g: (g, 0)),        # item index tile
            pl.BlockSpec((D, n_users), lambda g: (0, 0)),   # user table (resident)
            pl.BlockSpec((D, n_items), lambda g: (0, 0)),   # item table (resident)
        ],
        out_specs=pl.BlockSpec((1, BT), lambda g: (g, 0)),
        compiler_params=pltpu.CompilerParams(
            dimension_semantics=("parallel",),
            vmem_limit_bytes=vmem_limit,
        ),
    )(u_idx_p, i_idx_p, u_tab_t, i_tab_t)

    return out.reshape(-1)[:B]             # (B,)


if __name__ == "__main__":
    n_users, n_items, latent_dim = 16, 32, 128
    batch = 8

    key = jax.random.PRNGKey(0)
    k_u, k_i, k_uidx, k_iidx = jax.random.split(key, 4)

    # Deterministic "parameters" (nn.Embedding weights).
    u_emb = jax.random.normal(k_u, (n_users, latent_dim), dtype=jnp.float32)
    i_emb = jax.random.normal(k_i, (n_items, latent_dim), dtype=jnp.float32)

    # Example index inputs (like PyTorch LongTensor indices).
    u_idx = jax.random.randint(k_uidx, (batch,), 0, n_users, dtype=jnp.int32)
    i_idx = jax.random.randint(k_iidx, (batch,), 0, n_items, dtype=jnp.int32)

    out = mf_forward(u_emb, i_emb, u_idx, i_idx)
    out = jax.block_until_ready(out)

    # Pure-JAX reference check.
    ref = jnp.sum(u_emb[u_idx] * i_emb[i_idx], axis=1)
    assert out.shape == (batch,)
    assert jnp.allclose(out, ref, atol=1e-4, rtol=1e-4), (out, ref)

    print("KERNEL_OK")
</pallas_src>

<mosaic_0001>
module attributes {stable_mosaic.version = 11 : i64} {
  func.func @mf_kernel(%arg0: i32, %arg1: memref<1x256xi32, #tpu.memory_space<vmem>>, %arg2: memref<1x256xi32, #tpu.memory_space<vmem>>, %arg3: memref<128x16xf32, #tpu.memory_space<vmem>>, %arg4: memref<128x32xf32, #tpu.memory_space<vmem>>, %arg5: memref<1x256xf32, #tpu.memory_space<vmem>>) attributes {dimension_semantics = [#tpu.dimension_semantics<parallel>], iteration_bounds = array<i64: 1>, scalar_prefetch = 0 : i64, scratch_operands = 0 : i64, tpu.core_type = #tpu.core_type<tc>, window_params = [{transform_indices = @transform_0, window_bounds = array<i64: 1, 256>}, {transform_indices = @transform_1, window_bounds = array<i64: 1, 256>}, {pipeline_mode = #tpu.pipeline_mode<synchronous>, transform_indices = @transform_2, window_bounds = array<i64: 128, 16>}, {pipeline_mode = #tpu.pipeline_mode<synchronous>, transform_indices = @transform_3, window_bounds = array<i64: 128, 32>}, {transform_indices = @transform_4, window_bounds = array<i64: 1, 256>}]} {
    %c0 = arith.constant 0 : index
    %c0_0 = arith.constant 0 : index
    %0 = vector.load %arg1[%c0, %c0_0] : memref<1x256xi32, #tpu.memory_space<vmem>>, vector<1x256xi32>
    %c0_1 = arith.constant 0 : index
    %c0_2 = arith.constant 0 : index
    %1 = vector.load %arg2[%c0_1, %c0_2] : memref<1x256xi32, #tpu.memory_space<vmem>>, vector<1x256xi32>
    %2 = tpu.iota {dimensions = array<i32: 0>} : vector<16x256xi32>
    %3 = vector.broadcast %0 : vector<1x256xi32> to vector<16x256xi32>
    %4 = arith.cmpi eq, %2, %3 : vector<16x256xi32>
    %5 = tpu.iota {dimensions = array<i32: 0>} : vector<32x256xi32>
    %6 = vector.broadcast %1 : vector<1x256xi32> to vector<32x256xi32>
    %7 = arith.cmpi eq, %5, %6 : vector<32x256xi32>
    %c0_3 = arith.constant 0 : index
    %c0_4 = arith.constant 0 : index
    %8 = vector.load %arg3[%c0_3, %c0_4] : memref<128x16xf32, #tpu.memory_space<vmem>>, vector<128x16xf32>
    %9 = arith.extui %4 : vector<16x256xi1> to vector<16x256xi32>
    %10 = arith.sitofp %9 : vector<16x256xi32> to vector<16x256xf32>
    %cst = arith.constant dense<0.000000e+00> : vector<128x256xf32>
    %11 = tpu.matmul %8, %10, %cst {dimension_numbers = #tpu.dot_dimension_numbers<[1], [0], [0], [1], [0, 0, 1, 1], [], []>, precision = #tpu.contract_precision<fp32>} : vector<128x16xf32>, vector<16x256xf32>, vector<128x256xf32> -> vector<128x256xf32>
    %c0_5 = arith.constant 0 : index
    %c0_6 = arith.constant 0 : index
    %12 = vector.load %arg4[%c0_5, %c0_6] : memref<128x32xf32, #tpu.memory_space<vmem>>, vector<128x32xf32>
    %13 = arith.extui %7 : vector<32x256xi1> to vector<32x256xi32>
    %14 = arith.sitofp %13 : vector<32x256xi32> to vector<32x256xf32>
    %cst_7 = arith.constant dense<0.000000e+00> : vector<128x256xf32>
    %15 = tpu.matmul %12, %14, %cst_7 {dimension_numbers = #tpu.dot_dimension_numbers<[1], [0], [0], [1], [0, 0, 1, 1], [], []>, precision = #tpu.contract_precision<fp32>} : vector<128x32xf32>, vector<32x256xf32>, vector<128x256xf32> -> vector<128x256xf32>
    %16 = arith.mulf %11, %15 : vector<128x256xf32>
    %cst_8 = arith.constant dense<0.000000e+00> : vector<256xf32>
    %17 = vector.multi_reduction <add>, %16, %cst_8 [0] : vector<128x256xf32> to vector<256xf32>
    %18 = vector.shape_cast %17 : vector<256xf32> to vector<1x256xf32>
    %c0_9 = arith.constant 0 : index
    %c0_10 = arith.constant 0 : index
    %19 = vector.load %arg5[%c0_9, %c0_10] : memref<1x256xf32, #tpu.memory_space<vmem>>, vector<1x256xf32>
    tpu.vector_store %arg5[%c0_9, %c0_10], %18 {strides = array<i32>} : memref<1x256xf32, #tpu.memory_space<vmem>>, vector<1x256xf32>,
    return
  }
  func.func @transform_0(%arg0: i32) -> (i32, i32) {
    %c0_i32 = arith.constant 0 : i32
    %c0_i32_0 = arith.constant 0 : i32
    return %arg0, %c0_i32 : i32, i32
  }
  func.func @transform_1(%arg0: i32) -> (i32, i32) {
    %c0_i32 = arith.constant 0 : i32
    %c0_i32_0 = arith.constant 0 : i32
    return %arg0, %c0_i32 : i32, i32
  }
  func.func @transform_2(%arg0: i32) -> (i32, i32) {
    %c0_i32 = arith.constant 0 : i32
    %c0_i32_0 = arith.constant 0 : i32
    %c0_i32_1 = arith.constant 0 : i32
    return %c0_i32, %c0_i32_0 : i32, i32
  }
  func.func @transform_3(%arg0: i32) -> (i32, i32) {
    %c0_i32 = arith.constant 0 : i32
    %c0_i32_0 = arith.constant 0 : i32
    %c0_i32_1 = arith.constant 0 : i32
    return %c0_i32, %c0_i32_0 : i32, i32
  }
  func.func @transform_4(%arg0: i32) -> (i32, i32) {
    %c0_i32 = arith.constant 0 : i32
    %c0_i32_0 = arith.constant 0 : i32
    return %arg0, %c0_i32 : i32, i32
  }
}

</mosaic_0001>

<llo_original>
// kernel: tpu_custom_call.1
$region0: #{tpu_custom_call.1}
  #allocation0 [shape = 'u32[]', space=smem, size = 0x4, offset = 0x4, fixed_abs, tag = 'smem constant byte address 0x4 - core index']
  #allocation1 [shape = 'u32[72,128]{1,0:T(1,128)}', space=vmem, size = 0x9000, scoped, tag = 'internal scratch']
  %s0 = inlined_call_operand.vmem [shape: s32[1,256], index: 0, kind: input, shape index: {}]
  %s1 = inlined_call_operand.vmem [shape: s32[1,256], index: 1, kind: input, shape index: {}]
  %s2 = inlined_call_operand.vmem [shape: f32[128,16], index: 2, kind: input, shape index: {}]
  %s3 = inlined_call_operand.vmem [shape: f32[128,32], index: 3, kind: input, shape index: {}]
  %s4 = inlined_call_operand.hbm [shape: f32[1,256], index: 4, kind: output, shape index: {}]
  %s5 = sld [smem:[#allocation0]]
  $region26: #{tpu_custom_call.1} parent=0
    _
  %s7 = ssub.s32 1, %s5
  %s8 = scalar_select 0, %s7, %s5
  $region1: #{tpu_custom_call.1} parent=0
    #allocation2 [shape = 'u8[1024]{0}', space=vmem, size = 0x400, scoped, tag = 'output window, operand 0, single buffered']
    #allocation3 [shape = 's32[1]{0}', space=sflag, size = 0x4, scoped, tag = 'scoped memory for tpu_custom_call.1']
    %9 = vsyncpa [#allocation3], 0
    // Predicated region
    $region2: #{tpu_custom_call.1} parent=1 // pred_check
      _
    $region3: #{tpu_custom_call.1} parent=1 // pred_check_branch
      %11 = sbr.rel (0) target = $region5
    $region4: #{tpu_custom_call.1} parent=1 // pred_region
      _
    $region5: #{tpu_custom_call.1} parent=1 // pred_fallthru
      _
    // Predicated region
    $region6: #{tpu_custom_call.1} parent=1 // pred_check
      _
    $region7: #{tpu_custom_call.1} parent=1 // pred_check_branch
      %13 = sbr.rel (0) target = $region9
    $region8: #{tpu_custom_call.1} parent=1 // pred_region
      _
    $region9: #{tpu_custom_call.1} parent=1 // pred_fallthru
      _
    // Predicated region
    $region10: #{tpu_custom_call.1} parent=1 // pred_check
      _
    $region11: #{tpu_custom_call.1} parent=1 // pred_check_branch
      %15 = sbr.rel (0) target = $region13
    $region12: #{tpu_custom_call.1} parent=1 // pred_region
      _
    $region13: #{tpu_custom_call.1} parent=1 // pred_fallthru
      _
    // Predicated region
    $region14: #{tpu_custom_call.1} parent=1 // pred_check
      _
    $region15: #{tpu_custom_call.1} parent=1 // pred_check_branch
      %17 = sbr.rel (0) target = $region17
    $region16: #{tpu_custom_call.1} parent=1 // pred_region
      _
    $region17: #{tpu_custom_call.1} parent=1 // pred_fallthru
      _
    %v18 = vld [vmem:[%s0] sm:$0x3]
    %v19 = vld [vmem:[%s1] sm:$0x3]
    %v20 = vlaneseq
    %v21 = vshrl.u32 %v20, 7
    %v22 = vadd.s32 %v21, 8
    %v23 = vperm.slane %v18, 0
    %v24 = vperm.slane %v18, 1
    %vm25 = vcmp.eq.s32.totalorder %v21, %v23
    %vm26 = vcmp.eq.s32.totalorder %v21, %v24
    %vm27 = vcmp.eq.s32.totalorder %v22, %v23
    %vm28 = vcmp.eq.s32.totalorder %v22, %v24
    %v29 = vadd.s32 %v21, 16
    %v30 = vadd.s32 %v21, 24
    %v31 = vperm.slane %v19, 0
    %v32 = vperm.slane %v19, 1
    %vm33 = vcmp.eq.s32.totalorder %v21, %v31
    %vm34 = vcmp.eq.s32.totalorder %v21, %v32
    %vm35 = vcmp.eq.s32.totalorder %v22, %v31
    %vm36 = vcmp.eq.s32.totalorder %v22, %v32
    %vm37 = vcmp.eq.s32.totalorder %v29, %v31
    %vm38 = vcmp.eq.s32.totalorder %v29, %v32
    %vm39 = vcmp.eq.s32.totalorder %v30, %v31
    %vm40 = vcmp.eq.s32.totalorder %v30, %v32
    %v41 = vld [vmem:[%s2] sm:$0xff]
    %v42 = vld [vmem:[%s2 + $0x8] sm:$0xff]
    %v43 = vld [vmem:[%s2 + $0x10] sm:$0xff]
    %v44 = vld [vmem:[%s2 + $0x18] sm:$0xff]
    %v45 = vld [vmem:[%s2 + $0x20] sm:$0xff]
    %v46 = vld [vmem:[%s2 + $0x28] sm:$0xff]
    %v47 = vld [vmem:[%s2 + $0x30] sm:$0xff]
    %v48 = vld [vmem:[%s2 + $0x38] sm:$0xff]
    %v49 = vld [vmem:[%s2 + $0x40] sm:$0xff]
    %v50 = vld [vmem:[%s2 + $0x48] sm:$0xff]
    %v51 = vld [vmem:[%s2 + $0x50] sm:$0xff]
    %v52 = vld [vmem:[%s2 + $0x58] sm:$0xff]
    %v53 = vld [vmem:[%s2 + $0x60] sm:$0xff]
    %v54 = vld [vmem:[%s2 + $0x68] sm:$0xff]
    %v55 = vld [vmem:[%s2 + $0x70] sm:$0xff]
    %v56 = vld [vmem:[%s2 + $0x78] sm:$0xff]
    %v57 = vsel %vm25, 1, 0
    %v58 = vsel %vm26, 1, 0
    %v59 = vsel %vm27, 1, 0
    %v60 = vsel %vm28, 1, 0
    %v61 = vcvt.s32.f32 %v57
    %v62 = vcvt.s32.f32 %v58
    %v63 = vcvt.s32.f32 %v59
    %v64 = vcvt.s32.f32 %v60
    %vm65 = vcmask 130048
    %v67 = vsel %vm65, %v41, 0
    %v70 = vsel %vm65, %v42, 0
    %v73 = vsel %vm65, %v43, 0
    %v76 = vsel %vm65, %v44, 0
    %v79 = vsel %vm65, %v45, 0
    %v82 = vsel %vm65, %v46, 0
    %v85 = vsel %vm65, %v47, 0
    %v88 = vsel %vm65, %v48, 0
    %v91 = vsel %vm65, %v49, 0
    %v94 = vsel %vm65, %v50, 0
    %v97 = vsel %vm65, %v51, 0
    %v100 = vsel %vm65, %v52, 0
    %v103 = vsel %vm65, %v53, 0
    %v106 = vsel %vm65, %v54, 0
    %v109 = vsel %vm65, %v55, 0
    %v112 = vsel %vm65, %v56, 0
    %114 = vmatpush.msra.mxu0 0.0
    %115 = vmatpush.msra.mxu0 0.0
    %116 = vmatpush.msra.mxu0 0.0
    %117 = vmatpush.msra.mxu0 0.0
    %118 = vmatpush.msra.mxu0 0.0
    %119 = vmatpush.msra.mxu0 0.0
    %120 = vmatpush.msra.mxu0 0.0
    %121 = vmatpush.msra.mxu0 0.0
    %122 = vmatpush.msra.mxu0 0.0
    %123 = vmatpush.msra.mxu0 0.0
    %124 = vmatpush.msra.mxu0 0.0
    %125 = vmatpush.msra.mxu0 0.0
    %126 = vmatpush.msra.mxu0 0.0
    %127 = vmatpush.msra.mxu0 0.0
    %v128 = vand.u32 %v63, 4294901760
    %129 = vmatpush.msra.mxu0 %v128
    %v130 = vand.u32 %v61, 4294901760
    %131 = vmatpush.msra.mxu0 %v130
    %v132 = vand.u32 %v67, 4294901760
    %v133 = vsub.f32 %v67, %v132
    %v134 = vand.u32 %v133, 4294901760
    %v135 = vsub.f32 %v133, %v134
    %v136 = vand.u32 %v135, 4294901760
    %137 = vmatmul.f32.gmra.mxu0 %v136
    %v138 = vpop.f32.mrf.mxu0
    %v139 = vadd.f32 0.0, %v138
    %v140 = vand.u32 %v70, 4294901760
    %v141 = vsub.f32 %v70, %v140
    %v142 = vand.u32 %v141, 4294901760
    %v143 = vsub.f32 %v141, %v142
    %v144 = vand.u32 %v143, 4294901760
    %145 = vmatmul.f32.gmra.mxu0 %v144
    %v146 = vpop.f32.mrf.mxu0
    %v147 = vadd.f32 0.0, %v146
    %v148 = vand.u32 %v73, 4294901760
    %v149 = vsub.f32 %v73, %v148
    %v150 = vand.u32 %v149, 4294901760
    %v151 = vsub.f32 %v149, %v150
    %v152 = vand.u32 %v151, 4294901760
    %153 = vmatmul.f32.gmra.mxu0 %v152
    %v154 = vpop.f32.mrf.mxu0
    %v155 = vadd.f32 0.0, %v154
    %v156 = vand.u32 %v76, 4294901760
    %v157 = vsub.f32 %v76, %v156
    %v158 = vand.u32 %v157, 4294901760
    %v159 = vsub.f32 %v157, %v158
    %v160 = vand.u32 %v159, 4294901760
    %161 = vmatmul.f32.gmra.mxu0 %v160
    %v162 = vpop.f32.mrf.mxu0
    %v163 = vadd.f32 0.0, %v162
    %v164 = vand.u32 %v79, 4294901760
    %v165 = vsub.f32 %v79, %v164
    %v166 = vand.u32 %v165, 4294901760
    %v167 = vsub.f32 %v165, %v166
    %v168 = vand.u32 %v167, 4294901760
    %169 = vmatmul.f32.gmra.mxu0 %v168
    %v170 = vpop.f32.mrf.mxu0
    %v171 = vadd.f32 0.0, %v170
    %v172 = vand.u32 %v82, 4294901760
    %v173 = vsub.f32 %v82, %v172
    %v174 = vand.u32 %v173, 4294901760
    %v175 = vsub.f32 %v173, %v174
    %v176 = vand.u32 %v175, 4294901760
    %177 = vmatmul.f32.gmra.mxu0 %v176
    %v178 = vpop.f32.mrf.mxu0
    %v179 = vadd.f32 0.0, %v178
    %v180 = vand.u32 %v85, 4294901760
    %v181 = vsub.f32 %v85, %v180
    %v182 = vand.u32 %v181, 4294901760
    %v183 = vsub.f32 %v181, %v182
    %v184 = vand.u32 %v183, 4294901760
    %185 = vmatmul.f32.gmra.mxu0 %v184
    %v186 = vpop.f32.mrf.mxu0
    %v187 = vadd.f32 0.0, %v186
    %v188 = vand.u32 %v88, 4294901760
    %v189 = vsub.f32 %v88, %v188
    %v190 = vand.u32 %v189, 4294901760
    %v191 = vsub.f32 %v189, %v190
    %v192 = vand.u32 %v191, 4294901760
    %193 = vmatmul.f32.gmra.mxu0 %v192
    %v194 = vpop.f32.mrf.mxu0
    %v195 = vadd.f32 0.0, %v194
    %v196 = vand.u32 %v91, 4294901760
    %v197 = vsub.f32 %v91, %v196
    %v198 = vand.u32 %v197, 4294901760
    %v199 = vsub.f32 %v197, %v198
    %v200 = vand.u32 %v199, 4294901760
    %201 = vmatmul.f32.gmra.mxu0 %v200
    %v202 = vpop.f32.mrf.mxu0
    %v203 = vadd.f32 0.0, %v202
    %v204 = vand.u32 %v94, 4294901760
    %v205 = vsub.f32 %v94, %v204
    %v206 = vand.u32 %v205, 4294901760
    %v207 = vsub.f32 %v205, %v206
    %v208 = vand.u32 %v207, 4294901760
    %209 = vmatmul.f32.gmra.mxu0 %v208
    %v210 = vpop.f32.mrf.mxu0
    %v211 = vadd.f32 0.0, %v210
    %v212 = vand.u32 %v97, 4294901760
    %v213 = vsub.f32 %v97, %v212
    %v214 = vand.u32 %v213, 4294901760
    %v215 = vsub.f32 %v213, %v214
    %v216 = vand.u32 %v215, 4294901760
    %217 = vmatmul.f32.gmra.mxu0 %v216
    %v218 = vpop.f32.mrf.mxu0
    %v219 = vadd.f32 0.0, %v218
    %v220 = vand.u32 %v100, 4294901760
    %v221 = vsub.f32 %v100, %v220
    %v222 = vand.u32 %v221, 4294901760
    %v223 = vsub.f32 %v221, %v222
    %v224 = vand.u32 %v223, 4294901760
    %225 = vmatmul.f32.gmra.mxu0 %v224
    %v226 = vpop.f32.mrf.mxu0
    %v227 = vadd.f32 0.0, %v226
    %v228 = vand.u32 %v103, 4294901760
    %v229 = vsub.f32 %v103, %v228
    %v230 = vand.u32 %v229, 4294901760
    %v231 = vsub.f32 %v229, %v230
    %v232 = vand.u32 %v231, 4294901760
    %233 = vmatmul.f32.gmra.mxu0 %v232
    %v234 = vpop.f32.mrf.mxu0
    %v235 = vadd.f32 0.0, %v234
    %v236 = vand.u32 %v106, 4294901760
    %v237 = vsub.f32 %v106, %v236
    %v238 = vand.u32 %v237, 4294901760
    %v239 = vsub.f32 %v237, %v238
    %v240 = vand.u32 %v239, 4294901760
    %241 = vmatmul.f32.gmra.mxu0 %v240
    %v242 = vpop.f32.mrf.mxu0
    %v243 = vadd.f32 0.0, %v242
    %v244 = vand.u32 %v109, 4294901760
    %v245 = vsub.f32 %v109, %v244
    %v246 = vand.u32 %v245, 4294901760
    %v247 = vsub.f32 %v245, %v246
    %v248 = vand.u32 %v247, 4294901760
    %249 = vmatmul.f32.gmra.mxu0 %v248
    %v250 = vpop.f32.mrf.mxu0
    %v251 = vadd.f32 0.0, %v250
    %v252 = vand.u32 %v112, 4294901760
    %v253 = vsub.f32 %v112, %v252
    %v254 = vand.u32 %v253, 4294901760
    %v255 = vsub.f32 %v253, %v254
    %v256 = vand.u32 %v255, 4294901760
    %257 = vmatmul.f32.gmra.mxu0 %v256
    %v258 = vpop.f32.mrf.mxu0
    %v259 = vadd.f32 0.0, %v258
    %260 = vdwg.mxu0
    %261 = vmatpush.msra.mxu0 0.0
    %262 = vmatpush.msra.mxu0 0.0
    %263 = vmatpush.msra.mxu0 0.0
    %264 = vmatpush.msra.mxu0 0.0
    %265 = vmatpush.msra.mxu0 0.0
    %266 = vmatpush.msra.mxu0 0.0
    %267 = vmatpush.msra.mxu0 0.0
    %268 = vmatpush.msra.mxu0 0.0
    %269 = vmatpush.msra.mxu0 0.0
    %270 = vmatpush.msra.mxu0 0.0
    %271 = vmatpush.msra.mxu0 0.0
    %272 = vmatpush.msra.mxu0 0.0
    %273 = vmatpush.msra.mxu0 0.0
    %274 = vmatpush.msra.mxu0 0.0
    %v275 = vand.u32 %v63, 4294901760
    %v276 = vsub.f32 %v63, %v275
    %v277 = vand.u32 %v276, 4294901760
    %v278 = vsub.f32 %v276, %v277
    %v279 = vand.u32 %v278, 4294901760
    %280 = vmatpush.msra.mxu0 %v279
    %v281 = vand.u32 %v61, 4294901760
    %v282 = vsub.f32 %v61, %v281
    %v283 = vand.u32 %v282, 4294901760
    %v284 = vsub.f32 %v282, %v283
    %v285 = vand.u32 %v284, 4294901760
    %286 = vmatpush.msra.mxu0 %v285
    %v287 = vand.u32 %v67, 4294901760
    %288 = vmatmul.f32.gmra.mxu0 %v287
    %v289 = vpop.f32.mrf.mxu0
    %v290 = vadd.f32 %v139, %v289
    %v291 = vand.u32 %v70, 4294901760
    %292 = vmatmul.f32.gmra.mxu0 %v291
    %v293 = vpop.f32.mrf.mxu0
    %v294 = vadd.f32 %v147, %v293
    %v295 = vand.u32 %v73, 4294901760
    %296 = vmatmul.f32.gmra.mxu0 %v295
    %v297 = vpop.f32.mrf.mxu0
    %v298 = vadd.f32 %v155, %v297
    %v299 = vand.u32 %v76, 4294901760
    %300 = vmatmul.f32.gmra.mxu0 %v299
    %v301 = vpop.f32.mrf.mxu0
    %v302 = vadd.f32 %v163, %v301
    %v303 = vand.u32 %v79, 4294901760
    %304 = vmatmul.f32.gmra.mxu0 %v303
    %v305 = vpop.f32.mrf.mxu0
    %v306 = vadd.f32 %v171, %v305
    %v307 = vand.u32 %v82, 4294901760
    %308 = vmatmul.f32.gmra.mxu0 %v307
    %v309 = vpop.f32.mrf.mxu0
    %v310 = vadd.f32 %v179, %v309
    %v311 = vand.u32 %v85, 4294901760
    %312 = vmatmul.f32.gmra.mxu0 %v311
    %v313 = vpop.f32.mrf.mxu0
    %v314 = vadd.f32 %v187, %v313
    %v315 = vand.u32 %v88, 4294901760
    %316 = vmatmul.f32.gmra.mxu0 %v315
    %v317 = vpop.f32.mrf.mxu0
    %v318 = vadd.f32 %v195, %v317
    %v319 = vand.u32 %v91, 4294901760
    %320 = vmatmul.f32.gmra.mxu0 %v319
    %v321 = vpop.f32.mrf.mxu0
    %v322 = vadd.f32 %v203, %v321
    %v323 = vand.u32 %v94, 4294901760
    %324 = vmatmul.f32.gmra.mxu0 %v323
    %v325 = vpop.f32.mrf.mxu0
    %v326 = vadd.f32 %v211, %v325
    %v327 = vand.u32 %v97, 4294901760
    %328 = vmatmul.f32.gmra.mxu0 %v327
    %v329 = vpop.f32.mrf.mxu0
    %v330 = vadd.f32 %v219, %v329
    %v331 = vand.u32 %v100, 4294901760
    %332 = vmatmul.f32.gmra.mxu0 %v331
    %v333 = vpop.f32.mrf.mxu0
    %v334 = vadd.f32 %v227, %v333
    %v335 = vand.u32 %v103, 4294901760
    %336 = vmatmul.f32.gmra.mxu0 %v335
    %v337 = vpop.f32.mrf.mxu0
    %v338 = vadd.f32 %v235, %v337
    %v339 = vand.u32 %v106, 4294901760
    %340 = vmatmul.f32.gmra.mxu0 %v339
    %v341 = vpop.f32.mrf.mxu0
    %v342 = vadd.f32 %v243, %v341
    %v343 = vand.u32 %v109, 4294901760
    %344 = vmatmul.f32.gmra.mxu0 %v343
    %v345 = vpop.f32.mrf.mxu0
    %v346 = vadd.f32 %v251, %v345
    %v347 = vand.u32 %v112, 4294901760
    %348 = vmatmul.f32.gmra.mxu0 %v347
    %v349 = vpop.f32.mrf.mxu0
    %v350 = vadd.f32 %v259, %v349
    %351 = vdwg.mxu0
    %352 = vmatpush.msra.mxu0 0.0
    %353 = vmatpush.msra.mxu0 0.0
    %354 = vmatpush.msra.mxu0 0.0
    %355 = vmatpush.msra.mxu0 0.0
    %356 = vmatpush.msra.mxu0 0.0
    %357 = vmatpush.msra.mxu0 0.0
    %358 = vmatpush.msra.mxu0 0.0
    %359 = vmatpush.msra.mxu0 0.0
    %360 = vmatpush.msra.mxu0 0.0
    %361 = vmatpush.msra.mxu0 0.0
    %362 = vmatpush.msra.mxu0 0.0
    %363 = vmatpush.msra.mxu0 0.0
    %364 = vmatpush.msra.mxu0 0.0
    %365 = vmatpush.msra.mxu0 0.0
    %v366 = vand.u32 %v63, 4294901760
    %v367 = vsub.f32 %v63, %v366
    %368 = vmatpush.msra.mxu0 %v367
    %v369 = vand.u32 %v61, 4294901760
    %v370 = vsub.f32 %v61, %v369
    %371 = vmatpush.msra.mxu0 %v370
    %v372 = vand.u32 %v67, 4294901760
    %v373 = vsub.f32 %v67, %v372
    %374 = vmatmul.f32.gmra.mxu0 %v373
    %v375 = vpop.f32.mrf.mxu0
    %v376 = vadd.f32 %v290, %v375
    %v377 = vand.u32 %v70, 4294901760
    %v378 = vsub.f32 %v70, %v377
    %379 = vmatmul.f32.gmra.mxu0 %v378
    %v380 = vpop.f32.mrf.mxu0
    %v381 = vadd.f32 %v294, %v380
    %v382 = vand.u32 %v73, 4294901760
    %v383 = vsub.f32 %v73, %v382
    %384 = vmatmul.f32.gmra.mxu0 %v383
    %v385 = vpop.f32.mrf.mxu0
    %v386 = vadd.f32 %v298, %v385
    %v387 = vand.u32 %v76, 4294901760
    %v388 = vsub.f32 %v76, %v387
    %389 = vmatmul.f32.gmra.mxu0 %v388
    %v390 = vpop.f32.mrf.mxu0
    %v391 = vadd.f32 %v302, %v390
    %v392 = vand.u32 %v79, 4294901760
    %v393 = vsub.f32 %v79, %v392
    %394 = vmatmul.f32.gmra.mxu0 %v393
    %v395 = vpop.f32.mrf.mxu0
    %v396 = vadd.f32 %v306, %v395
    %v397 = vand.u32 %v82, 4294901760
    %v398 = vsub.f32 %v82, %v397
    %399 = vmatmul.f32.gmra.mxu0 %v398
    %v400 = vpop.f32.mrf.mxu0
    %v401 = vadd.f32 %v310, %v400
    %v402 = vand.u32 %v85, 4294901760
    %v403 = vsub.f32 %v85, %v402
    %404 = vmatmul.f32.gmra.mxu0 %v403
    %v405 = vpop.f32.mrf.mxu0
    %v406 = vadd.f32 %v314, %v405
    %v407 = vand.u32 %v88, 4294901760
    %v408 = vsub.f32 %v88, %v407
    %409 = vmatmul.f32.gmra.mxu0 %v408
    %v410 = vpop.f32.mrf.mxu0
    %v411 = vadd.f32 %v318, %v410
    %v412 = vand.u32 %v91, 4294901760
    %v413 = vsub.f32 %v91, %v412
    %414 = vmatmul.f32.gmra.mxu0 %v413
    %v415 = vpop.f32.mrf.mxu0
    %v416 = vadd.f32 %v322, %v415
    %v417 = vand.u32 %v94, 4294901760
    %v418 = vsub.f32 %v94, %v417
    %419 = vmatmul.f32.gmra.mxu0 %v418
    %v420 = vpop.f32.mrf.mxu0
    %v421 = vadd.f32 %v326, %v420
    %v422 = vand.u32 %v97, 4294901760
    %v423 = vsub.f32 %v97, %v422
    %424 = vmatmul.f32.gmra.mxu0 %v423
    %v425 = vpop.f32.mrf.mxu0
    %v426 = vadd.f32 %v330, %v425
    %v427 = vand.u32 %v100, 4294901760
    %v428 = vsub.f32 %v100, %v427
    %429 = vmatmul.f32.gmra.mxu0 %v428
    %v430 = vpop.f32.mrf.mxu0
    %v431 = vadd.f32 %v334, %v430
    %v432 = vand.u32 %v103, 4294901760
    %v433 = vsub.f32 %v103, %v432
    %434 = vmatmul.f32.gmra.mxu0 %v433
    %v435 = vpop.f32.mrf.mxu0
    %v436 = vadd.f32 %v338, %v435
    %v437 = vand.u32 %v106, 4294901760
    %v438 = vsub.f32 %v106, %v437
    %439 = vmatmul.f32.gmra.mxu0 %v438
    %v440 = vpop.f32.mrf.mxu0
    %v441 = vadd.f32 %v342, %v440
    %v442 = vand.u32 %v109, 4294901760
    %v443 = vsub.f32 %v109, %v442
    %444 = vmatmul.f32.gmra.mxu0 %v443
    %v445 = vpop.f32.mrf.mxu0
    %v446 = vadd.f32 %v346, %v445
    %v447 = vand.u32 %v112, 4294901760
    %v448 = vsub.f32 %v112, %v447
    %449 = vmatmul.f32.gmra.mxu0 %v448
    %v450 = vpop.f32.mrf.mxu0
    %v451 = vadd.f32 %v350, %v450
    %452 = vdwg.mxu0
    %453 = vmatpush.msra.mxu0 0.0
    %454 = vmatpush.msra.mxu0 0.0
    %455 = vmatpush.msra.mxu0 0.0
    %456 = vmatpush.msra.mxu0 0.0
    %457 = vmatpush.msra.mxu0 0.0
    %458 = vmatpush.msra.mxu0 0.0
    %459 = vmatpush.msra.mxu0 0.0
    %460 = vmatpush.msra.mxu0 0.0
    %461 = vmatpush.msra.mxu0 0.0
    %462 = vmatpush.msra.mxu0 0.0
    %463 = vmatpush.msra.mxu0 0.0
    %464 = vmatpush.msra.mxu0 0.0
    %465 = vmatpush.msra.mxu0 0.0
    %466 = vmatpush.msra.mxu0 0.0
    %v467 = vand.u32 %v63, 4294901760
    %468 = vmatpush.msra.mxu0 %v467
    %v469 = vand.u32 %v61, 4294901760
    %470 = vmatpush.msra.mxu0 %v469
    %v471 = vand.u32 %v67, 4294901760
    %v472 = vsub.f32 %v67, %v471
    %v473 = vand.u32 %v472, 4294901760
    %474 = vmatmul.f32.gmra.mxu0 %v473
    %v475 = vpop.f32.mrf.mxu0
    %v476 = vadd.f32 %v376, %v475
    %v477 = vand.u32 %v70, 4294901760
    %v478 = vsub.f32 %v70, %v477
    %v479 = vand.u32 %v478, 4294901760
    %480 = vmatmul.f32.gmra.mxu0 %v479
    %v481 = vpop.f32.mrf.mxu0
    %v482 = vadd.f32 %v381, %v481
    %v483 = vand.u32 %v73, 4294901760
    %v484 = vsub.f32 %v73, %v483
    %v485 = vand.u32 %v484, 4294901760
    %486 = vmatmul.f32.gmra.mxu0 %v485
    %v487 = vpop.f32.mrf.mxu0
    %v488 = vadd.f32 %v386, %v487
    %v489 = vand.u32 %v76, 4294901760
    %v490 = vsub.f32 %v76, %v489
    %v491 = vand.u32 %v490, 4294901760
    %492 = vmatmul.f32.gmra.mxu0 %v491
    %v493 = vpop.f32.mrf.mxu0
    %v494 = vadd.f32 %v391, %v493
    %v495 = vand.u32 %v79, 4294901760
    %v496 = vsub.f32 %v79, %v495
    %v497 = vand.u32 %v496, 4294901760
    %498 = vmatmul.f32.gmra.mxu0 %v497
    %v499 = vpop.f32.mrf.mxu0
    %v500 = vadd.f32 %v396, %v499
    %v501 = vand.u32 %v82, 4294901760
    %v502 = vsub.f32 %v82, %v501
    %v503 = vand.u32 %v502, 4294901760
    %504 = vmatmul.f32.gmra.mxu0 %v503
    %v505 = vpop.f32.mrf.mxu0
    %v506 = vadd.f32 %v401, %v505
    %v507 = vand.u32 %v85, 4294901760
    %v508 = vsub.f32 %v85, %v507
    %v509 = vand.u32 %v508, 4294901760
    %510 = vmatmul.f32.gmra.mxu0 %v509
    %v511 = vpop.f32.mrf.mxu0
    %v512 = vadd.f32 %v406, %v511
    %v513 = vand.u32 %v88, 4294901760
    %v514 = vsub.f32 %v88, %v513
    %v515 = vand.u32 %v514, 4294901760
    %516 = vmatmul.f32.gmra.mxu0 %v515
    %v517 = vpop.f32.mrf.mxu0
    %v518 = vadd.f32 %v411, %v517
    %v519 = vand.u32 %v91, 4294901760
    %v520 = vsub.f32 %v91, %v519
    %v521 = vand.u32 %v520, 4294901760
    %522 = vmatmul.f32.gmra.mxu0 %v521
    %v523 = vpop.f32.mrf.mxu0
    %v524 = vadd.f32 %v416, %v523
    %v525 = vand.u32 %v94, 4294901760
    %v526 = vsub.f32 %v94, %v525
    %v527 = vand.u32 %v526, 4294901760
    %528 = vmatmul.f32.gmra.mxu0 %v527
    %v529 = vpop.f32.mrf.mxu0
    %v530 = vadd.f32 %v421, %v529
    %v531 = vand.u32 %v97, 4294901760
    %v532 = vsub.f32 %v97, %v531
    %v533 = vand.u32 %v532, 4294901760
    %534 = vmatmul.f32.gmra.mxu0 %v533
    %v535 = vpop.f32.mrf.mxu0
    %v536 = vadd.f32 %v426, %v535
    %v537 = vand.u32 %v100, 4294901760
    %v538 = vsub.f32 %v100, %v537
    %v539 = vand.u32 %v538, 4294901760
    %540 = vmatmul.f32.gmra.mxu0 %v539
    %v541 = vpop.f32.mrf.mxu0
    %v542 = vadd.f32 %v431, %v541
    %v543 = vand.u32 %v103, 4294901760
    %v544 = vsub.f32 %v103, %v543
    %v545 = vand.u32 %v544, 4294901760
    %546 = vmatmul.f32.gmra.mxu0 %v545
    %v547 = vpop.f32.mrf.mxu0
    %v548 = vadd.f32 %v436, %v547
    %v549 = vand.u32 %v106, 4294901760
    %v550 = vsub.f32 %v106, %v549
    %v551 = vand.u32 %v550, 4294901760
    %552 = vmatmul.f32.gmra.mxu0 %v551
    %v553 = vpop.f32.mrf.mxu0
    %v554 = vadd.f32 %v441, %v553
    %v555 = vand.u32 %v109, 4294901760
    %v556 = vsub.f32 %v109, %v555
    %v557 = vand.u32 %v556, 4294901760
    %558 = vmatmul.f32.gmra.mxu0 %v557
    %v559 = vpop.f32.mrf.mxu0
    %v560 = vadd.f32 %v446, %v559
    %v561 = vand.u32 %v112, 4294901760
    %v562 = vsub.f32 %v112, %v561
    %v563 = vand.u32 %v562, 4294901760
    %564 = vmatmul.f32.gmra.mxu0 %v563
    %v565 = vpop.f32.mrf.mxu0
    %v566 = vadd.f32 %v451, %v565
    %567 = vdwg.mxu0
    %568 = vmatpush.msra.mxu0 0.0
    %569 = vmatpush.msra.mxu0 0.0
    %570 = vmatpush.msra.mxu0 0.0
    %571 = vmatpush.msra.mxu0 0.0
    %572 = vmatpush.msra.mxu0 0.0
    %573 = vmatpush.msra.mxu0 0.0
    %574 = vmatpush.msra.mxu0 0.0
    %575 = vmatpush.msra.mxu0 0.0
    %576 = vmatpush.msra.mxu0 0.0
    %577 = vmatpush.msra.mxu0 0.0
    %578 = vmatpush.msra.mxu0 0.0
    %579 = vmatpush.msra.mxu0 0.0
    %580 = vmatpush.msra.mxu0 0.0
    %581 = vmatpush.msra.mxu0 0.0
    %v582 = vand.u32 %v63, 4294901760
    %v583 = vsub.f32 %v63, %v582
    %v584 = vand.u32 %v583, 4294901760
    %585 = vmatpush.msra.mxu0 %v584
    %v586 = vand.u32 %v61, 4294901760
    %v587 = vsub.f32 %v61, %v586
    %v588 = vand.u32 %v587, 4294901760
    %589 = vmatpush.msra.mxu0 %v588
    %v590 = vand.u32 %v67, 4294901760
    %591 = vmatmul.f32.gmra.mxu0 %v590
    %v592 = vpop.f32.mrf.mxu0
    %v593 = vadd.f32 %v476, %v592
    %v594 = vand.u32 %v70, 4294901760
    %595 = vmatmul.f32.gmra.mxu0 %v594
    %v596 = vpop.f32.mrf.mxu0
    %v597 = vadd.f32 %v482, %v596
    %v598 = vand.u32 %v73, 4294901760
    %599 = vmatmul.f32.gmra.mxu0 %v598
    %v600 = vpop.f32.mrf.mxu0
    %v601 = vadd.f32 %v488, %v600
    %v602 = vand.u32 %v76, 4294901760
    %603 = vmatmul.f32.gmra.mxu0 %v602
    %v604 = vpop.f32.mrf.mxu0
    %v605 = vadd.f32 %v494, %v604
    %v606 = vand.u32 %v79, 4294901760
    %607 = vmatmul.f32.gmra.mxu0 %v606
    %v608 = vpop.f32.mrf.mxu0
    %v609 = vadd.f32 %v500, %v608
    %v610 = vand.u32 %v82, 4294901760
    %611 = vmatmul.f32.gmra.mxu0 %v610
    %v612 = vpop.f32.mrf.mxu0
    %v613 = vadd.f32 %v506, %v612
    %v614 = vand.u32 %v85, 4294901760
    %615 = vmatmul.f32.gmra.mxu0 %v614
    %v616 = vpop.f32.mrf.mxu0
    %v617 = vadd.f32 %v512, %v616
    %v618 = vand.u32 %v88, 4294901760
    %619 = vmatmul.f32.gmra.mxu0 %v618
    %v620 = vpop.f32.mrf.mxu0
    %v621 = vadd.f32 %v518, %v620
    %v622 = vand.u32 %v91, 4294901760
    %623 = vmatmul.f32.gmra.mxu0 %v622
    %v624 = vpop.f32.mrf.mxu0
    %v625 = vadd.f32 %v524, %v624
    %v626 = vand.u32 %v94, 4294901760
    %627 = vmatmul.f32.gmra.mxu0 %v626
    %v628 = vpop.f32.mrf.mxu0
    %v629 = vadd.f32 %v530, %v628
    %v630 = vand.u32 %v97, 4294901760
    %631 = vmatmul.f32.gmra.mxu0 %v630
    %v632 = vpop.f32.mrf.mxu0
    %v633 = vadd.f32 %v536, %v632
    %v634 = vand.u32 %v100, 4294901760
    %635 = vmatmul.f32.gmra.mxu0 %v634
    %v636 = vpop.f32.mrf.mxu0
    %v637 = vadd.f32 %v542, %v636
    %v638 = vand.u32 %v103, 4294901760
    %639 = vmatmul.f32.gmra.mxu0 %v638
    %v640 = vpop.f32.mrf.mxu0
    %v641 = vadd.f32 %v548, %v640
    %v642 = vand.u32 %v106, 4294901760
    %643 = vmatmul.f32.gmra.mxu0 %v642
    %v644 = vpop.f32.mrf.mxu0
    %v645 = vadd.f32 %v554, %v644
    %v646 = vand.u32 %v109, 4294901760
    %647 = vmatmul.f32.gmra.mxu0 %v646
    %v648 = vpop.f32.mrf.mxu0
    %v649 = vadd.f32 %v560, %v648
    %v650 = vand.u32 %v112, 4294901760
    %651 = vmatmul.f32.gmra.mxu0 %v650
    %v652 = vpop.f32.mrf.mxu0
    %v653 = vadd.f32 %v566, %v652
    %654 = vdwg.mxu0
    %655 = vmatpush.msra.mxu0 0.0
    %656 = vmatpush.msra.mxu0 0.0
    %657 = vmatpush.msra.mxu0 0.0
    %658 = vmatpush.msra.mxu0 0.0
    %659 = vmatpush.msra.mxu0 0.0
    %660 = vmatpush.msra.mxu0 0.0
    %661 = vmatpush.msra.mxu0 0.0
    %662 = vmatpush.msra.mxu0 0.0
    %663 = vmatpush.msra.mxu0 0.0
    %664 = vmatpush.msra.mxu0 0.0
    %665 = vmatpush.msra.mxu0 0.0
    %666 = vmatpush.msra.mxu0 0.0
    %667 = vmatpush.msra.mxu0 0.0
    %668 = vmatpush.msra.mxu0 0.0
    %v669 = vand.u32 %v63, 4294901760
    %670 = vmatpush.msra.mxu0 %v669
    %v671 = vand.u32 %v61, 4294901760
    %672 = vmatpush.msra.mxu0 %v671
    %v673 = vand.u32 %v67, 4294901760
    %674 = vmatmul.f32.gmra.mxu0 %v673
    %v675 = vpop.f32.mrf.mxu0
    %v676 = vadd.f32 %v593, %v675
    %v677 = vand.u32 %v70, 4294901760
    %678 = vmatmul.f32.gmra.mxu0 %v677
    %v679 = vpop.f32.mrf.mxu0
    %v680 = vadd.f32 %v597, %v679
    %v681 = vand.u32 %v73, 4294901760
    %682 = vmatmul.f32.gmra.mxu0 %v681
    %v683 = vpop.f32.mrf.mxu0
    %v684 = vadd.f32 %v601, %v683
    %v685 = vand.u32 %v76, 4294901760
    %686 = vmatmul.f32.gmra.mxu0 %v685
    %v687 = vpop.f32.mrf.mxu0
    %v688 = vadd.f32 %v605, %v687
    %v689 = vand.u32 %v79, 4294901760
    %690 = vmatmul.f32.gmra.mxu0 %v689
    %v691 = vpop.f32.mrf.mxu0
    %v692 = vadd.f32 %v609, %v691
    %v693 = vand.u32 %v82, 4294901760
    %694 = vmatmul.f32.gmra.mxu0 %v693
    %v695 = vpop.f32.mrf.mxu0
    %v696 = vadd.f32 %v613, %v695
    %v697 = vand.u32 %v85, 4294901760
    %698 = vmatmul.f32.gmra.mxu0 %v697
    %v699 = vpop.f32.mrf.mxu0
    %v700 = vadd.f32 %v617, %v699
    %v701 = vand.u32 %v88, 4294901760
    %702 = vmatmul.f32.gmra.mxu0 %v701
    %v703 = vpop.f32.mrf.mxu0
    %v704 = vadd.f32 %v621, %v703
    %v705 = vand.u32 %v91, 4294901760
    %706 = vmatmul.f32.gmra.mxu0 %v705
    %v707 = vpop.f32.mrf.mxu0
    %v708 = vadd.f32 %v625, %v707
    %v709 = vand.u32 %v94, 4294901760
    %710 = vmatmul.f32.gmra.mxu0 %v709
    %v711 = vpop.f32.mrf.mxu0
    %v712 = vadd.f32 %v629, %v711
    %v713 = vand.u32 %v97, 4294901760
    %714 = vmatmul.f32.gmra.mxu0 %v713
    %v715 = vpop.f32.mrf.mxu0
    %v716 = vadd.f32 %v633, %v715
    %v717 = vand.u32 %v100, 4294901760
    %718 = vmatmul.f32.gmra.mxu0 %v717
    %v719 = vpop.f32.mrf.mxu0
    %v720 = vadd.f32 %v637, %v719
    %v721 = vand.u32 %v103, 4294901760
    %722 = vmatmul.f32.gmra.mxu0 %v721
    %v723 = vpop.f32.mrf.mxu0
    %v724 = vadd.f32 %v641, %v723
    %v725 = vand.u32 %v106, 4294901760
    %726 = vmatmul.f32.gmra.mxu0 %v725
    %v727 = vpop.f32.mrf.mxu0
    %v728 = vadd.f32 %v645, %v727
    %v729 = vand.u32 %v109, 4294901760
    %730 = vmatmul.f32.gmra.mxu0 %v729
    %v731 = vpop.f32.mrf.mxu0
    %v732 = vadd.f32 %v649, %v731
    %v733 = vand.u32 %v112, 4294901760
    %734 = vmatmul.f32.gmra.mxu0 %v733
    %v735 = vpop.f32.mrf.mxu0
    %v736 = vadd.f32 %v653, %v735
    %737 = vdwg.mxu0
    %738 = vmatpush.msra.mxu0 0.0
    %739 = vmatpush.msra.mxu0 0.0
    %740 = vmatpush.msra.mxu0 0.0
    %741 = vmatpush.msra.mxu0 0.0
    %742 = vmatpush.msra.mxu0 0.0
    %743 = vmatpush.msra.mxu0 0.0
    %744 = vmatpush.msra.mxu0 0.0
    %745 = vmatpush.msra.mxu0 0.0
    %746 = vmatpush.msra.mxu0 0.0
    %747 = vmatpush.msra.mxu0 0.0
    %748 = vmatpush.msra.mxu0 0.0
    %749 = vmatpush.msra.mxu0 0.0
    %750 = vmatpush.msra.mxu0 0.0
    %751 = vmatpush.msra.mxu0 0.0
    %v752 = vand.u32 %v64, 4294901760
    %753 = vmatpush.msra.mxu0 %v752
    %v754 = vand.u32 %v62, 4294901760
    %755 = vmatpush.msra.mxu0 %v754
    %v756 = vand.u32 %v67, 4294901760
    %v757 = vsub.f32 %v67, %v756
    %v758 = vand.u32 %v757, 4294901760
    %v759 = vsub.f32 %v757, %v758
    %v760 = vand.u32 %v759, 4294901760
    %761 = vmatmul.f32.gmra.mxu0 %v760
    %v762 = vpop.f32.mrf.mxu0
    %v763 = vadd.f32 0.0, %v762
    %v764 = vand.u32 %v70, 4294901760
    %v765 = vsub.f32 %v70, %v764
    %v766 = vand.u32 %v765, 4294901760
    %v767 = vsub.f32 %v765, %v766
    %v768 = vand.u32 %v767, 4294901760
    %769 = vmatmul.f32.gmra.mxu0 %v768
    %v770 = vpop.f32.mrf.mxu0
    %v771 = vadd.f32 0.0, %v770
    %v772 = vand.u32 %v73, 4294901760
    %v773 = vsub.f32 %v73, %v772
    %v774 = vand.u32 %v773, 4294901760
    %v775 = vsub.f32 %v773, %v774
    %v776 = vand.u32 %v775, 4294901760
    %777 = vmatmul.f32.gmra.mxu0 %v776
    %v778 = vpop.f32.mrf.mxu0
    %v779 = vadd.f32 0.0, %v778
    %v780 = vand.u32 %v76, 4294901760
    %v781 = vsub.f32 %v76, %v780
    %v782 = vand.u32 %v781, 4294901760
    %v783 = vsub.f32 %v781, %v782
    %v784 = vand.u32 %v783, 4294901760
    %785 = vmatmul.f32.gmra.mxu0 %v784
    %v786 = vpop.f32.mrf.mxu0
    %v787 = vadd.f32 0.0, %v786
    %v788 = vand.u32 %v79, 4294901760
    %v789 = vsub.f32 %v79, %v788
    %v790 = vand.u32 %v789, 4294901760
    %v791 = vsub.f32 %v789, %v790
    %v792 = vand.u32 %v791, 4294901760
    %793 = vmatmul.f32.gmra.mxu0 %v792
    %v794 = vpop.f32.mrf.mxu0
    %v795 = vadd.f32 0.0, %v794
    %v796 = vand.u32 %v82, 4294901760
    %v797 = vsub.f32 %v82, %v796
    %v798 = vand.u32 %v797, 4294901760
    %v799 = vsub.f32 %v797, %v798
    %v800 = vand.u32 %v799, 4294901760
    %801 = vmatmul.f32.gmra.mxu0 %v800
    %v802 = vpop.f32.mrf.mxu0
    %v803 = vadd.f32 0.0, %v802
    %v804 = vand.u32 %v85, 4294901760
    %v805 = vsub.f32 %v85, %v804
    %v806 = vand.u32 %v805, 4294901760
    %v807 = vsub.f32 %v805, %v806
    %v808 = vand.u32 %v807, 4294901760
    %809 = vmatmul.f32.gmra.mxu0 %v808
    %v810 = vpop.f32.mrf.mxu0
    %v811 = vadd.f32 0.0, %v810
    %v812 = vand.u32 %v88, 4294901760
    %v813 = vsub.f32 %v88, %v812
    %v814 = vand.u32 %v813, 4294901760
    %v815 = vsub.f32 %v813, %v814
    %v816 = vand.u32 %v815, 4294901760
    %817 = vmatmul.f32.gmra.mxu0 %v816
    %v818 = vpop.f32.mrf.mxu0
    %v819 = vadd.f32 0.0, %v818
    %v820 = vand.u32 %v91, 4294901760
    %v821 = vsub.f32 %v91, %v820
    %v822 = vand.u32 %v821, 4294901760
    %v823 = vsub.f32 %v821, %v822
    %v824 = vand.u32 %v823, 4294901760
    %825 = vmatmul.f32.gmra.mxu0 %v824
    %v826 = vpop.f32.mrf.mxu0
    %v827 = vadd.f32 0.0, %v826
    %v828 = vand.u32 %v94, 4294901760
    %v829 = vsub.f32 %v94, %v828
    %v830 = vand.u32 %v829, 4294901760
    %v831 = vsub.f32 %v829, %v830
    %v832 = vand.u32 %v831, 4294901760
    %833 = vmatmul.f32.gmra.mxu0 %v832
    %v834 = vpop.f32.mrf.mxu0
    %v835 = vadd.f32 0.0, %v834
    %v836 = vand.u32 %v97, 4294901760
    %v837 = vsub.f32 %v97, %v836
    %v838 = vand.u32 %v837, 4294901760
    %v839 = vsub.f32 %v837, %v838
    %v840 = vand.u32 %v839, 4294901760
    %841 = vmatmul.f32.gmra.mxu0 %v840
    %v842 = vpop.f32.mrf.mxu0
    %v843 = vadd.f32 0.0, %v842
    %v844 = vand.u32 %v100, 4294901760
    %v845 = vsub.f32 %v100, %v844
    %v846 = vand.u32 %v845, 4294901760
    %v847 = vsub.f32 %v845, %v846
    %v848 = vand.u32 %v847, 4294901760
    %849 = vmatmul.f32.gmra.mxu0 %v848
    %v850 = vpop.f32.mrf.mxu0
    %v851 = vadd.f32 0.0, %v850
    %v852 = vand.u32 %v103, 4294901760
    %v853 = vsub.f32 %v103, %v852
    %v854 = vand.u32 %v853, 4294901760
    %v855 = vsub.f32 %v853, %v854
    %v856 = vand.u32 %v855, 4294901760
    %857 = vmatmul.f32.gmra.mxu0 %v856
    %v858 = vpop.f32.mrf.mxu0
    %v859 = vadd.f32 0.0, %v858
    %v860 = vand.u32 %v106, 4294901760
    %v861 = vsub.f32 %v106, %v860
    %v862 = vand.u32 %v861, 4294901760
    %v863 = vsub.f32 %v861, %v862
    %v864 = vand.u32 %v863, 4294901760
    %865 = vmatmul.f32.gmra.mxu0 %v864
    %v866 = vpop.f32.mrf.mxu0
    %v867 = vadd.f32 0.0, %v866
    %v868 = vand.u32 %v109, 4294901760
    %v869 = vsub.f32 %v109, %v868
    %v870 = vand.u32 %v869, 4294901760
    %v871 = vsub.f32 %v869, %v870
    %v872 = vand.u32 %v871, 4294901760
    %873 = vmatmul.f32.gmra.mxu0 %v872
    %v874 = vpop.f32.mrf.mxu0
    %v875 = vadd.f32 0.0, %v874
    %v876 = vand.u32 %v112, 4294901760
    %v877 = vsub.f32 %v112, %v876
    %v878 = vand.u32 %v877, 4294901760
    %v879 = vsub.f32 %v877, %v878
    %v880 = vand.u32 %v879, 4294901760
    %881 = vmatmul.f32.gmra.mxu0 %v880
    %v882 = vpop.f32.mrf.mxu0
    %v883 = vadd.f32 0.0, %v882
    %884 = vdwg.mxu0
    %885 = vmatpush.msra.mxu0 0.0
    %886 = vmatpush.msra.mxu0 0.0
    %887 = vmatpush.msra.mxu0 0.0
    %888 = vmatpush.msra.mxu0 0.0
    %889 = vmatpush.msra.mxu0 0.0
    %890 = vmatpush.msra.mxu0 0.0
    %891 = vmatpush.msra.mxu0 0.0
    %892 = vmatpush.msra.mxu0 0.0
    %893 = vmatpush.msra.mxu0 0.0
    %894 = vmatpush.msra.mxu0 0.0
    %895 = vmatpush.msra.mxu0 0.0
    %896 = vmatpush.msra.mxu0 0.0
    %897 = vmatpush.msra.mxu0 0.0
    %898 = vmatpush.msra.mxu0 0.0
    %v899 = vand.u32 %v64, 4294901760
    %v900 = vsub.f32 %v64, %v899
    %v901 = vand.u32 %v900, 4294901760
    %v902 = vsub.f32 %v900, %v901
    %v903 = vand.u32 %v902, 4294901760
    %904 = vmatpush.msra.mxu0 %v903
    %v905 = vand.u32 %v62, 4294901760
    %v906 = vsub.f32 %v62, %v905
    %v907 = vand.u32 %v906, 4294901760
    %v908 = vsub.f32 %v906, %v907
    %v909 = vand.u32 %v908, 4294901760
    %910 = vmatpush.msra.mxu0 %v909
    %v911 = vand.u32 %v67, 4294901760
    %912 = vmatmul.f32.gmra.mxu0 %v911
    %v913 = vpop.f32.mrf.mxu0
    %v914 = vadd.f32 %v763, %v913
    %v915 = vand.u32 %v70, 4294901760
    %916 = vmatmul.f32.gmra.mxu0 %v915
    %v917 = vpop.f32.mrf.mxu0
    %v918 = vadd.f32 %v771, %v917
    %v919 = vand.u32 %v73, 4294901760
    %920 = vmatmul.f32.gmra.mxu0 %v919
    %v921 = vpop.f32.mrf.mxu0
    %v922 = vadd.f32 %v779, %v921
    %v923 = vand.u32 %v76, 4294901760
    %924 = vmatmul.f32.gmra.mxu0 %v923
    %v925 = vpop.f32.mrf.mxu0
    %v926 = vadd.f32 %v787, %v925
    %v927 = vand.u32 %v79, 4294901760
    %928 = vmatmul.f32.gmra.mxu0 %v927
    %v929 = vpop.f32.mrf.mxu0
    %v930 = vadd.f32 %v795, %v929
    %v931 = vand.u32 %v82, 4294901760
    %932 = vmatmul.f32.gmra.mxu0 %v931
    %v933 = vpop.f32.mrf.mxu0
    %v934 = vadd.f32 %v803, %v933
    %v935 = vand.u32 %v85, 4294901760
    %936 = vmatmul.f32.gmra.mxu0 %v935
    %v937 = vpop.f32.mrf.mxu0
    %v938 = vadd.f32 %v811, %v937
    %v939 = vand.u32 %v88, 4294901760
    %940 = vmatmul.f32.gmra.mxu0 %v939
    %v941 = vpop.f32.mrf.mxu0
    %v942 = vadd.f32 %v819, %v941
    %v943 = vand.u32 %v91, 4294901760
    %944 = vmatmul.f32.gmra.mxu0 %v943
    %v945 = vpop.f32.mrf.mxu0
    %v946 = vadd.f32 %v827, %v945
    %v947 = vand.u32 %v94, 4294901760
    %948 = vmatmul.f32.gmra.mxu0 %v947
    %v949 = vpop.f32.mrf.mxu0
    %v950 = vadd.f32 %v835, %v949
    %v951 = vand.u32 %v97, 4294901760
    %952 = vmatmul.f32.gmra.mxu0 %v951
    %v953 = vpop.f32.mrf.mxu0
    %v954 = vadd.f32 %v843, %v953
    %v955 = vand.u32 %v100, 4294901760
    %956 = vmatmul.f32.gmra.mxu0 %v955
    %v957 = vpop.f32.mrf.mxu0
    %v958 = vadd.f32 %v851, %v957
    %v959 = vand.u32 %v103, 4294901760
    %960 = vmatmul.f32.gmra.mxu0 %v959
    %v961 = vpop.f32.mrf.mxu0
    %v962 = vadd.f32 %v859, %v961
    %v963 = vand.u32 %v106, 4294901760
    %964 = vmatmul.f32.gmra.mxu0 %v963
    %v965 = vpop.f32.mrf.mxu0
    %v966 = vadd.f32 %v867, %v965
    %v967 = vand.u32 %v109, 4294901760
    %968 = vmatmul.f32.gmra.mxu0 %v967
    %v969 = vpop.f32.mrf.mxu0
    %v970 = vadd.f32 %v875, %v969
    %v971 = vand.u32 %v112, 4294901760
    %972 = vmatmul.f32.gmra.mxu0 %v971
    %v973 = vpop.f32.mrf.mxu0
    %v974 = vadd.f32 %v883, %v973
    %975 = vdwg.mxu0
    %976 = vmatpush.msra.mxu0 0.0
    %977 = vmatpush.msra.mxu0 0.0
    %978 = vmatpush.msra.mxu0 0.0
    %979 = vmatpush.msra.mxu0 0.0
    %980 = vmatpush.msra.mxu0 0.0
    %981 = vmatpush.msra.mxu0 0.0
    %982 = vmatpush.msra.mxu0 0.0
    %983 = vmatpush.msra.mxu0 0.0
    %984 = vmatpush.msra.mxu0 0.0
    %985 = vmatpush.msra.mxu0 0.0
    %986 = vmatpush.msra.mxu0 0.0
    %987 = vmatpush.msra.mxu0 0.0
    %988 = vmatpush.msra.mxu0 0.0
    %989 = vmatpush.msra.mxu0 0.0
    %v990 = vand.u32 %v64, 4294901760
    %v991 = vsub.f32 %v64, %v990
    %992 = vmatpush.msra.mxu0 %v991
    %v993 = vand.u32 %v62, 4294901760
    %v994 = vsub.f32 %v62, %v993
    %995 = vmatpush.msra.mxu0 %v994
    %v996 = vand.u32 %v67, 4294901760
    %v997 = vsub.f32 %v67, %v996
    %998 = vmatmul.f32.gmra.mxu0 %v997
    %v999 = vpop.f32.mrf.mxu0
    %v1000 = vadd.f32 %v914, %v999
    %v1001 = vand.u32 %v70, 4294901760
    %v1002 = vsub.f32 %v70, %v1001
    %1003 = vmatmul.f32.gmra.mxu0 %v1002
    %v1004 = vpop.f32.mrf.mxu0
    %v1005 = vadd.f32 %v918, %v1004
    %v1006 = vand.u32 %v73, 4294901760
    %v1007 = vsub.f32 %v73, %v1006
    %1008 = vmatmul.f32.gmra.mxu0 %v1007
    %v1009 = vpop.f32.mrf.mxu0
    %v1010 = vadd.f32 %v922, %v1009
    %v1011 = vand.u32 %v76, 4294901760
    %v1012 = vsub.f32 %v76, %v1011
    %1013 = vmatmul.f32.gmra.mxu0 %v1012
    %v1014 = vpop.f32.mrf.mxu0
    %v1015 = vadd.f32 %v926, %v1014
    %v1016 = vand.u32 %v79, 4294901760
    %v1017 = vsub.f32 %v79, %v1016
    %1018 = vmatmul.f32.gmra.mxu0 %v1017
    %v1019 = vpop.f32.mrf.mxu0
    %v1020 = vadd.f32 %v930, %v1019
    %v1021 = vand.u32 %v82, 4294901760
    %v1022 = vsub.f32 %v82, %v1021
    %1023 = vmatmul.f32.gmra.mxu0 %v1022
    %v1024 = vpop.f32.mrf.mxu0
    %v1025 = vadd.f32 %v934, %v1024
    %v1026 = vand.u32 %v85, 4294901760
    %v1027 = vsub.f32 %v85, %v1026
    %1028 = vmatmul.f32.gmra.mxu0 %v1027
    %v1029 = vpop.f32.mrf.mxu0
    %v1030 = vadd.f32 %v938, %v1029
    %v1031 = vand.u32 %v88, 4294901760
    %v1032 = vsub.f32 %v88, %v1031
    %1033 = vmatmul.f32.gmra.mxu0 %v1032
    %v1034 = vpop.f32.mrf.mxu0
    %v1035 = vadd.f32 %v942, %v1034
    %v1036 = vand.u32 %v91, 4294901760
    %v1037 = vsub.f32 %v91, %v1036
    %1038 = vmatmul.f32.gmra.mxu0 %v1037
    %v1039 = vpop.f32.mrf.mxu0
    %v1040 = vadd.f32 %v946, %v1039
    %v1041 = vand.u32 %v94, 4294901760
    %v1042 = vsub.f32 %v94, %v1041
    %1043 = vmatmul.f32.gmra.mxu0 %v1042
    %v1044 = vpop.f32.mrf.mxu0
    %v1045 = vadd.f32 %v950, %v1044
    %v1046 = vand.u32 %v97, 4294901760
    %v1047 = vsub.f32 %v97, %v1046
    %1048 = vmatmul.f32.gmra.mxu0 %v1047
    %v1049 = vpop.f32.mrf.mxu0
    %v1050 = vadd.f32 %v954, %v1049
    %v1051 = vand.u32 %v100, 4294901760
    %v1052 = vsub.f32 %v100, %v1051
    %1053 = vmatmul.f32.gmra.mxu0 %v1052
    %v1054 = vpop.f32.mrf.mxu0
    %v1055 = vadd.f32 %v958, %v1054
    %v1056 = vand.u32 %v103, 4294901760
    %v1057 = vsub.f32 %v103, %v1056
    %1058 = vmatmul.f32.gmra.mxu0 %v1057
    %v1059 = vpop.f32.mrf.mxu0
    %v1060 = vadd.f32 %v962, %v1059
    %v1061 = vand.u32 %v106, 4294901760
    %v1062 = vsub.f32 %v106, %v1061
    %1063 = vmatmul.f32.gmra.mxu0 %v1062
    %v1064 = vpop.f32.mrf.mxu0
    %v1065 = vadd.f32 %v966, %v1064
    %v1066 = vand.u32 %v109, 4294901760
    %v1067 = vsub.f32 %v109, %v1066
    %1068 = vmatmul.f32.gmra.mxu0 %v1067
    %v1069 = vpop.f32.mrf.mxu0
    %v1070 = vadd.f32 %v970, %v1069
    %v1071 = vand.u32 %v112, 4294901760
    %v1072 = vsub.f32 %v112, %v1071
    %1073 = vmatmul.f32.gmra.mxu0 %v1072
    %v1074 = vpop.f32.mrf.mxu0
    %v1075 = vadd.f32 %v974, %v1074
    %1076 = vdwg.mxu0
    %1077 = vmatpush.msra.mxu0 0.0
    %1078 = vmatpush.msra.mxu0 0.0
    %1079 = vmatpush.msra.mxu0 0.0
    %1080 = vmatpush.msra.mxu0 0.0
    %1081 = vmatpush.msra.mxu0 0.0
    %1082 = vmatpush.msra.mxu0 0.0
    %1083 = vmatpush.msra.mxu0 0.0
    %1084 = vmatpush.msra.mxu0 0.0
    %1085 = vmatpush.msra.mxu0 0.0
    %1086 = vmatpush.msra.mxu0 0.0
    %1087 = vmatpush.msra.mxu0 0.0
    %1088 = vmatpush.msra.mxu0 0.0
    %1089 = vmatpush.msra.mxu0 0.0
    %1090 = vmatpush.msra.mxu0 0.0
    %v1091 = vand.u32 %v64, 4294901760
    %1092 = vmatpush.msra.mxu0 %v1091
    %v1093 = vand.u32 %v62, 4294901760
    %1094 = vmatpush.msra.mxu0 %v1093
    %v1095 = vand.u32 %v67, 4294901760
    %v1096 = vsub.f32 %v67, %v1095
    %v1097 = vand.u32 %v1096, 4294901760
    %1098 = vmatmul.f32.gmra.mxu0 %v1097
    %v1099 = vpop.f32.mrf.mxu0
    %v1100 = vadd.f32 %v1000, %v1099
    %v1101 = vand.u32 %v70, 4294901760
    %v1102 = vsub.f32 %v70, %v1101
    %v1103 = vand.u32 %v1102, 4294901760
    %1104 = vmatmul.f32.gmra.mxu0 %v1103
    %v1105 = vpop.f32.mrf.mxu0
    %v1106 = vadd.f32 %v1005, %v1105
    %v1107 = vand.u32 %v73, 4294901760
    %v1108 = vsub.f32 %v73, %v1107
    %v1109 = vand.u32 %v1108, 4294901760
    %1110 = vmatmul.f32.gmra.mxu0 %v1109
    %v1111 = vpop.f32.mrf.mxu0
    %v1112 = vadd.f32 %v1010, %v1111
    %v1113 = vand.u32 %v76, 4294901760
    %v1114 = vsub.f32 %v76, %v1113
    %v1115 = vand.u32 %v1114, 4294901760
    %1116 = vmatmul.f32.gmra.mxu0 %v1115
    %v1117 = vpop.f32.mrf.mxu0
    %v1118 = vadd.f32 %v1015, %v1117
    %v1119 = vand.u32 %v79, 4294901760
    %v1120 = vsub.f32 %v79, %v1119
    %v1121 = vand.u32 %v1120, 4294901760
    %1122 = vmatmul.f32.gmra.mxu0 %v1121
    %v1123 = vpop.f32.mrf.mxu0
    %v1124 = vadd.f32 %v1020, %v1123
    %v1125 = vand.u32 %v82, 4294901760
    %v1126 = vsub.f32 %v82, %v1125
    %v1127 = vand.u32 %v1126, 4294901760
    %1128 = vmatmul.f32.gmra.mxu0 %v1127
    %v1129 = vpop.f32.mrf.mxu0
    %v1130 = vadd.f32 %v1025, %v1129
    %v1131 = vand.u32 %v85, 4294901760
    %v1132 = vsub.f32 %v85, %v1131
    %v1133 = vand.u32 %v1132, 4294901760
    %1134 = vmatmul.f32.gmra.mxu0 %v1133
    %v1135 = vpop.f32.mrf.mxu0
    %v1136 = vadd.f32 %v1030, %v1135
    %v1137 = vand.u32 %v88, 4294901760
    %v1138 = vsub.f32 %v88, %v1137
    %v1139 = vand.u32 %v1138, 4294901760
    %1140 = vmatmul.f32.gmra.mxu0 %v1139
    %v1141 = vpop.f32.mrf.mxu0
    %v1142 = vadd.f32 %v1035, %v1141
    %v1143 = vand.u32 %v91, 4294901760
    %v1144 = vsub.f32 %v91, %v1143
    %v1145 = vand.u32 %v1144, 4294901760
    %1146 = vmatmul.f32.gmra.mxu0 %v1145
    %v1147 = vpop.f32.mrf.mxu0
    %v1148 = vadd.f32 %v1040, %v1147
    %v1149 = vand.u32 %v94, 4294901760
    %v1150 = vsub.f32 %v94, %v1149
    %v1151 = vand.u32 %v1150, 4294901760
    %1152 = vmatmul.f32.gmra.mxu0 %v1151
    %v1153 = vpop.f32.mrf.mxu0
    %v1154 = vadd.f32 %v1045, %v1153
    %v1155 = vand.u32 %v97, 4294901760
    %v1156 = vsub.f32 %v97, %v1155
    %v1157 = vand.u32 %v1156, 4294901760
    %1158 = vmatmul.f32.gmra.mxu0 %v1157
    %v1159 = vpop.f32.mrf.mxu0
    %v1160 = vadd.f32 %v1050, %v1159
    %v1161 = vand.u32 %v100, 4294901760
    %v1162 = vsub.f32 %v100, %v1161
    %v1163 = vand.u32 %v1162, 4294901760
    %1164 = vmatmul.f32.gmra.mxu0 %v1163
    %v1165 = vpop.f32.mrf.mxu0
    %v1166 = vadd.f32 %v1055, %v1165
    %v1167 = vand.u32 %v103, 4294901760
    %v1168 = vsub.f32 %v103, %v1167
    %v1169 = vand.u32 %v1168, 4294901760
    %1170 = vmatmul.f32.gmra.mxu0 %v1169
    %v1171 = vpop.f32.mrf.mxu0
    %v1172 = vadd.f32 %v1060, %v1171
    %v1173 = vand.u32 %v106, 4294901760
    %v1174 = vsub.f32 %v106, %v1173
    %v1175 = vand.u32 %v1174, 4294901760
    %1176 = vmatmul.f32.gmra.mxu0 %v1175
    %v1177 = vpop.f32.mrf.mxu0
    %v1178 = vadd.f32 %v1065, %v1177
    %v1179 = vand.u32 %v109, 4294901760
    %v1180 = vsub.f32 %v109, %v1179
    %v1181 = vand.u32 %v1180, 4294901760
    %1182 = vmatmul.f32.gmra.mxu0 %v1181
    %v1183 = vpop.f32.mrf.mxu0
    %v1184 = vadd.f32 %v1070, %v1183
    %v1185 = vand.u32 %v112, 4294901760
    %v1186 = vsub.f32 %v112, %v1185
    %v1187 = vand.u32 %v1186, 4294901760
    %1188 = vmatmul.f32.gmra.mxu0 %v1187
    %v1189 = vpop.f32.mrf.mxu0
    %v1190 = vadd.f32 %v1075, %v1189
    %1191 = vdwg.mxu0
    %1192 = vmatpush.msra.mxu0 0.0
    %1193 = vmatpush.msra.mxu0 0.0
    %1194 = vmatpush.msra.mxu0 0.0
    %1195 = vmatpush.msra.mxu0 0.0
    %1196 = vmatpush.msra.mxu0 0.0
    %1197 = vmatpush.msra.mxu0 0.0
    %1198 = vmatpush.msra.mxu0 0.0
    %1199 = vmatpush.msra.mxu0 0.0
    %1200 = vmatpush.msra.mxu0 0.0
    %1201 = vmatpush.msra.mxu0 0.0
    %1202 = vmatpush.msra.mxu0 0.0
    %1203 = vmatpush.msra.mxu0 0.0
    %1204 = vmatpush.msra.mxu0 0.0
    %1205 = vmatpush.msra.mxu0 0.0
    %v1206 = vand.u32 %v64, 4294901760
    %v1207 = vsub.f32 %v64, %v1206
    %v1208 = vand.u32 %v1207, 4294901760
    %1209 = vmatpush.msra.mxu0 %v1208
    %v1210 = vand.u32 %v62, 4294901760
    %v1211 = vsub.f32 %v62, %v1210
    %v1212 = vand.u32 %v1211, 4294901760
    %1213 = vmatpush.msra.mxu0 %v1212
    %v1214 = vand.u32 %v67, 4294901760
    %1215 = vmatmul.f32.gmra.mxu0 %v1214
    %v1216 = vpop.f32.mrf.mxu0
    %v1217 = vadd.f32 %v1100, %v1216
    %v1218 = vand.u32 %v70, 4294901760
    %1219 = vmatmul.f32.gmra.mxu0 %v1218
    %v1220 = vpop.f32.mrf.mxu0
    %v1221 = vadd.f32 %v1106, %v1220
    %v1222 = vand.u32 %v73, 4294901760
    %1223 = vmatmul.f32.gmra.mxu0 %v1222
    %v1224 = vpop.f32.mrf.mxu0
    %v1225 = vadd.f32 %v1112, %v1224
    %v1226 = vand.u32 %v76, 4294901760
    %1227 = vmatmul.f32.gmra.mxu0 %v1226
    %v1228 = vpop.f32.mrf.mxu0
    %v1229 = vadd.f32 %v1118, %v1228
    %v1230 = vand.u32 %v79, 4294901760
    %1231 = vmatmul.f32.gmra.mxu0 %v1230
    %v1232 = vpop.f32.mrf.mxu0
    %v1233 = vadd.f32 %v1124, %v1232
    %v1234 = vand.u32 %v82, 4294901760
    %1235 = vmatmul.f32.gmra.mxu0 %v1234
    %v1236 = vpop.f32.mrf.mxu0
    %v1237 = vadd.f32 %v1130, %v1236
    %v1238 = vand.u32 %v85, 4294901760
    %1239 = vmatmul.f32.gmra.mxu0 %v1238
    %v1240 = vpop.f32.mrf.mxu0
    %v1241 = vadd.f32 %v1136, %v1240
    %v1242 = vand.u32 %v88, 4294901760
    %1243 = vmatmul.f32.gmra.mxu0 %v1242
    %v1244 = vpop.f32.mrf.mxu0
    %v1245 = vadd.f32 %v1142, %v1244
    %v1246 = vand.u32 %v91, 4294901760
    %1247 = vmatmul.f32.gmra.mxu0 %v1246
    %v1248 = vpop.f32.mrf.mxu0
    %v1249 = vadd.f32 %v1148, %v1248
    %v1250 = vand.u32 %v94, 4294901760
    %1251 = vmatmul.f32.gmra.mxu0 %v1250
    %v1252 = vpop.f32.mrf.mxu0
    %v1253 = vadd.f32 %v1154, %v1252
    %v1254 = vand.u32 %v97, 4294901760
    %1255 = vmatmul.f32.gmra.mxu0 %v1254
    %v1256 = vpop.f32.mrf.mxu0
    %v1257 = vadd.f32 %v1160, %v1256
    %v1258 = vand.u32 %v100, 4294901760
    %1259 = vmatmul.f32.gmra.mxu0 %v1258
    %v1260 = vpop.f32.mrf.mxu0
    %v1261 = vadd.f32 %v1166, %v1260
    %v1262 = vand.u32 %v103, 4294901760
    %1263 = vmatmul.f32.gmra.mxu0 %v1262
    %v1264 = vpop.f32.mrf.mxu0
    %v1265 = vadd.f32 %v1172, %v1264
    %v1266 = vand.u32 %v106, 4294901760
    %1267 = vmatmul.f32.gmra.mxu0 %v1266
    %v1268 = vpop.f32.mrf.mxu0
    %v1269 = vadd.f32 %v1178, %v1268
    %v1270 = vand.u32 %v109, 4294901760
    %1271 = vmatmul.f32.gmra.mxu0 %v1270
    %v1272 = vpop.f32.mrf.mxu0
    %v1273 = vadd.f32 %v1184, %v1272
    %v1274 = vand.u32 %v112, 4294901760
    %1275 = vmatmul.f32.gmra.mxu0 %v1274
    %v1276 = vpop.f32.mrf.mxu0
    %v1277 = vadd.f32 %v1190, %v1276
    %1278 = vdwg.mxu0
    %1279 = vmatpush.msra.mxu0 0.0
    %1280 = vmatpush.msra.mxu0 0.0
    %1281 = vmatpush.msra.mxu0 0.0
    %1282 = vmatpush.msra.mxu0 0.0
    %1283 = vmatpush.msra.mxu0 0.0
    %1284 = vmatpush.msra.mxu0 0.0
    %1285 = vmatpush.msra.mxu0 0.0
    %1286 = vmatpush.msra.mxu0 0.0
    %1287 = vmatpush.msra.mxu0 0.0
    %1288 = vmatpush.msra.mxu0 0.0
    %1289 = vmatpush.msra.mxu0 0.0
    %1290 = vmatpush.msra.mxu0 0.0
    %1291 = vmatpush.msra.mxu0 0.0
    %1292 = vmatpush.msra.mxu0 0.0
    %v1293 = vand.u32 %v64, 4294901760
    %1294 = vmatpush.msra.mxu0 %v1293
    %v1295 = vand.u32 %v62, 4294901760
    %1296 = vmatpush.msra.mxu0 %v1295
    %v1297 = vand.u32 %v67, 4294901760
    %1298 = vmatmul.f32.gmra.mxu0 %v1297
    %v1299 = vpop.f32.mrf.mxu0
    %v1300 = vadd.f32 %v1217, %v1299
    %v1301 = vand.u32 %v70, 4294901760
    %1302 = vmatmul.f32.gmra.mxu0 %v1301
    %v1303 = vpop.f32.mrf.mxu0
    %v1304 = vadd.f32 %v1221, %v1303
    %v1305 = vand.u32 %v73, 4294901760
    %1306 = vmatmul.f32.gmra.mxu0 %v1305
    %v1307 = vpop.f32.mrf.mxu0
    %v1308 = vadd.f32 %v1225, %v1307
    %v1309 = vand.u32 %v76, 4294901760
    %1310 = vmatmul.f32.gmra.mxu0 %v1309
    %v1311 = vpop.f32.mrf.mxu0
    %v1312 = vadd.f32 %v1229, %v1311
    %v1313 = vand.u32 %v79, 4294901760
    %1314 = vmatmul.f32.gmra.mxu0 %v1313
    %v1315 = vpop.f32.mrf.mxu0
    %v1316 = vadd.f32 %v1233, %v1315
    %v1317 = vand.u32 %v82, 4294901760
    %1318 = vmatmul.f32.gmra.mxu0 %v1317
    %v1319 = vpop.f32.mrf.mxu0
    %v1320 = vadd.f32 %v1237, %v1319
    %v1321 = vand.u32 %v85, 4294901760
    %1322 = vmatmul.f32.gmra.mxu0 %v1321
    %v1323 = vpop.f32.mrf.mxu0
    %v1324 = vadd.f32 %v1241, %v1323
    %v1325 = vand.u32 %v88, 4294901760
    %1326 = vmatmul.f32.gmra.mxu0 %v1325
    %v1327 = vpop.f32.mrf.mxu0
    %v1328 = vadd.f32 %v1245, %v1327
    %v1329 = vand.u32 %v91, 4294901760
    %1330 = vmatmul.f32.gmra.mxu0 %v1329
    %v1331 = vpop.f32.mrf.mxu0
    %v1332 = vadd.f32 %v1249, %v1331
    %v1333 = vand.u32 %v94, 4294901760
    %1334 = vmatmul.f32.gmra.mxu0 %v1333
    %v1335 = vpop.f32.mrf.mxu0
    %v1336 = vadd.f32 %v1253, %v1335
    %v1337 = vand.u32 %v97, 4294901760
    %1338 = vmatmul.f32.gmra.mxu0 %v1337
    %v1339 = vpop.f32.mrf.mxu0
    %v1340 = vadd.f32 %v1257, %v1339
    %v1341 = vand.u32 %v100, 4294901760
    %1342 = vmatmul.f32.gmra.mxu0 %v1341
    %v1343 = vpop.f32.mrf.mxu0
    %v1344 = vadd.f32 %v1261, %v1343
    %v1345 = vand.u32 %v103, 4294901760
    %1346 = vmatmul.f32.gmra.mxu0 %v1345
    %v1347 = vpop.f32.mrf.mxu0
    %v1348 = vadd.f32 %v1265, %v1347
    %v1349 = vand.u32 %v106, 4294901760
    %1350 = vmatmul.f32.gmra.mxu0 %v1349
    %v1351 = vpop.f32.mrf.mxu0
    %v1352 = vadd.f32 %v1269, %v1351
    %v1353 = vand.u32 %v109, 4294901760
    %1354 = vmatmul.f32.gmra.mxu0 %v1353
    %v1355 = vpop.f32.mrf.mxu0
    %v1356 = vadd.f32 %v1273, %v1355
    %v1357 = vand.u32 %v112, 4294901760
    %1358 = vmatmul.f32.gmra.mxu0 %v1357
    %v1359 = vpop.f32.mrf.mxu0
    %v1360 = vadd.f32 %v1277, %v1359
    %1361 = vdwg.mxu0
    %v1362 = vld [vmem:[%s3] sm:$0xff]
    %v1363 = vld [vmem:[%s3 + $0x8] sm:$0xff]
    %v1364 = vld [vmem:[%s3 + $0x10] sm:$0xff]
    %v1365 = vld [vmem:[%s3 + $0x18] sm:$0xff]
    %v1366 = vld [vmem:[%s3 + $0x20] sm:$0xff]
    %v1367 = vld [vmem:[%s3 + $0x28] sm:$0xff]
    %v1368 = vld [vmem:[%s3 + $0x30] sm:$0xff]
    %v1369 = vld [vmem:[%s3 + $0x38] sm:$0xff]
    %v1370 = vld [vmem:[%s3 + $0x40] sm:$0xff]
    %v1371 = vld [vmem:[%s3 + $0x48] sm:$0xff]
    %v1372 = vld [vmem:[%s3 + $0x50] sm:$0xff]
    %v1373 = vld [vmem:[%s3 + $0x58] sm:$0xff]
    %v1374 = vld [vmem:[%s3 + $0x60] sm:$0xff]
    %v1375 = vld [vmem:[%s3 + $0x68] sm:$0xff]
    %v1376 = vld [vmem:[%s3 + $0x70] sm:$0xff]
    %v1377 = vld [vmem:[%s3 + $0x78] sm:$0xff]
    %v1378 = vsel %vm33, 1, 0
    %v1379 = vsel %vm34, 1, 0
    %v1380 = vsel %vm35, 1, 0
    %v1381 = vsel %vm36, 1, 0
    %v1382 = vsel %vm37, 1, 0
    %v1383 = vsel %vm38, 1, 0
    %v1384 = vsel %vm39, 1, 0
    %v1385 = vsel %vm40, 1, 0
    %v1386 = vcvt.s32.f32 %v1378
    %v1387 = vcvt.s32.f32 %v1379
    %v1388 = vcvt.s32.f32 %v1380
    %v1389 = vcvt.s32.f32 %v1381
    %v1390 = vcvt.s32.f32 %v1382
    %v1391 = vcvt.s32.f32 %v1383
    %v1392 = vcvt.s32.f32 %v1384
    %v1393 = vcvt.s32.f32 %v1385
    %vm1394 = vcmask 261120
    %v1396 = vsel %vm1394, %v1362, 0
    %v1399 = vsel %vm1394, %v1363, 0
    %v1402 = vsel %vm1394, %v1364, 0
    %v1405 = vsel %vm1394, %v1365, 0
    %v1408 = vsel %vm1394, %v1366, 0
    %v1411 = vsel %vm1394, %v1367, 0
    %v1414 = vsel %vm1394, %v1368, 0
    %v1417 = vsel %vm1394, %v1369, 0
    %v1420 = vsel %vm1394, %v1370, 0
    %v1423 = vsel %vm1394, %v1371, 0
    %v1426 = vsel %vm1394, %v1372, 0
    %v1429 = vsel %vm1394, %v1373, 0
    %v1432 = vsel %vm1394, %v1374, 0
    %v1435 = vsel %vm1394, %v1375, 0
    %v1438 = vsel %vm1394, %v1376, 0
    %v1441 = vsel %vm1394, %v1377, 0
    %1443 = vmatpush.msra.mxu0 0.0
    %1444 = vmatpush.msra.mxu0 0.0
    %1445 = vmatpush.msra.mxu0 0.0
    %1446 = vmatpush.msra.mxu0 0.0
    %1447 = vmatpush.msra.mxu0 0.0
    %1448 = vmatpush.msra.mxu0 0.0
    %1449 = vmatpush.msra.mxu0 0.0
    %1450 = vmatpush.msra.mxu0 0.0
    %1451 = vmatpush.msra.mxu0 0.0
    %1452 = vmatpush.msra.mxu0 0.0
    %1453 = vmatpush.msra.mxu0 0.0
    %1454 = vmatpush.msra.mxu0 0.0
    %v1455 = vand.u32 %v1392, 4294901760
    %1456 = vmatpush.msra.mxu0 %v1455
    %v1457 = vand.u32 %v1390, 4294901760
    %1458 = vmatpush.msra.mxu0 %v1457
    %v1459 = vand.u32 %v1388, 4294901760
    %1460 = vmatpush.msra.mxu0 %v1459
    %v1461 = vand.u32 %v1386, 4294901760
    %1462 = vmatpush.msra.mxu0 %v1461
    %v1463 = vand.u32 %v1396, 4294901760
    %v1464 = vsub.f32 %v1396, %v1463
    %v1465 = vand.u32 %v1464, 4294901760
    %v1466 = vsub.f32 %v1464, %v1465
    %v1467 = vand.u32 %v1466, 4294901760
    %1468 = vmatmul.f32.gmra.mxu0 %v1467
    %v1469 = vpop.f32.mrf.mxu0
    %v1470 = vadd.f32 0.0, %v1469
    %v1471 = vand.u32 %v1399, 4294901760
    %v1472 = vsub.f32 %v1399, %v1471
    %v1473 = vand.u32 %v1472, 4294901760
    %v1474 = vsub.f32 %v1472, %v1473
    %v1475 = vand.u32 %v1474, 4294901760
    %1476 = vmatmul.f32.gmra.mxu0 %v1475
    %v1477 = vpop.f32.mrf.mxu0
    %v1478 = vadd.f32 0.0, %v1477
    %v1479 = vand.u32 %v1402, 4294901760
    %v1480 = vsub.f32 %v1402, %v1479
    %v1481 = vand.u32 %v1480, 4294901760
    %v1482 = vsub.f32 %v1480, %v1481
    %v1483 = vand.u32 %v1482, 4294901760
    %1484 = vmatmul.f32.gmra.mxu0 %v1483
    %v1485 = vpop.f32.mrf.mxu0
    %v1486 = vadd.f32 0.0, %v1485
    %v1487 = vand.u32 %v1405, 4294901760
    %v1488 = vsub.f32 %v1405, %v1487
    %v1489 = vand.u32 %v1488, 4294901760
    %v1490 = vsub.f32 %v1488, %v1489
    %v1491 = vand.u32 %v1490, 4294901760
    %1492 = vmatmul.f32.gmra.mxu0 %v1491
    %v1493 = vpop.f32.mrf.mxu0
    %v1494 = vadd.f32 0.0, %v1493
    %v1495 = vand.u32 %v1408, 4294901760
    %v1496 = vsub.f32 %v1408, %v1495
    %v1497 = vand.u32 %v1496, 4294901760
    %v1498 = vsub.f32 %v1496, %v1497
    %v1499 = vand.u32 %v1498, 4294901760
    %1500 = vmatmul.f32.gmra.mxu0 %v1499
    %v1501 = vpop.f32.mrf.mxu0
    %v1502 = vadd.f32 0.0, %v1501
    %v1503 = vand.u32 %v1411, 4294901760
    %v1504 = vsub.f32 %v1411, %v1503
    %v1505 = vand.u32 %v1504, 4294901760
    %v1506 = vsub.f32 %v1504, %v1505
    %v1507 = vand.u32 %v1506, 4294901760
    %1508 = vmatmul.f32.gmra.mxu0 %v1507
    %v1509 = vpop.f32.mrf.mxu0
    %v1510 = vadd.f32 0.0, %v1509
    %v1511 = vand.u32 %v1414, 4294901760
    %v1512 = vsub.f32 %v1414, %v1511
    %v1513 = vand.u32 %v1512, 4294901760
    %v1514 = vsub.f32 %v1512, %v1513
    %v1515 = vand.u32 %v1514, 4294901760
    %1516 = vmatmul.f32.gmra.mxu0 %v1515
    %v1517 = vpop.f32.mrf.mxu0
    %v1518 = vadd.f32 0.0, %v1517
    %v1519 = vand.u32 %v1417, 4294901760
    %v1520 = vsub.f32 %v1417, %v1519
    %v1521 = vand.u32 %v1520, 4294901760
    %v1522 = vsub.f32 %v1520, %v1521
    %v1523 = vand.u32 %v1522, 4294901760
    %1524 = vmatmul.f32.gmra.mxu0 %v1523
    %v1525 = vpop.f32.mrf.mxu0
    %v1526 = vadd.f32 0.0, %v1525
    %v1527 = vand.u32 %v1420, 4294901760
    %v1528 = vsub.f32 %v1420, %v1527
    %v1529 = vand.u32 %v1528, 4294901760
    %v1530 = vsub.f32 %v1528, %v1529
    %v1531 = vand.u32 %v1530, 4294901760
    %1532 = vmatmul.f32.gmra.mxu0 %v1531
    %v1533 = vpop.f32.mrf.mxu0
    %v1534 = vadd.f32 0.0, %v1533
    %v1535 = vand.u32 %v1423, 4294901760
    %v1536 = vsub.f32 %v1423, %v1535
    %v1537 = vand.u32 %v1536, 4294901760
    %v1538 = vsub.f32 %v1536, %v1537
    %v1539 = vand.u32 %v1538, 4294901760
    %1540 = vmatmul.f32.gmra.mxu0 %v1539
    %v1541 = vpop.f32.mrf.mxu0
    %v1542 = vadd.f32 0.0, %v1541
    %v1543 = vand.u32 %v1426, 4294901760
    %v1544 = vsub.f32 %v1426, %v1543
    %v1545 = vand.u32 %v1544, 4294901760
    %v1546 = vsub.f32 %v1544, %v1545
    %v1547 = vand.u32 %v1546, 4294901760
    %1548 = vmatmul.f32.gmra.mxu0 %v1547
    %v1549 = vpop.f32.mrf.mxu0
    %v1550 = vadd.f32 0.0, %v1549
    %v1551 = vand.u32 %v1429, 4294901760
    %v1552 = vsub.f32 %v1429, %v1551
    %v1553 = vand.u32 %v1552, 4294901760
    %v1554 = vsub.f32 %v1552, %v1553
    %v1555 = vand.u32 %v1554, 4294901760
    %1556 = vmatmul.f32.gmra.mxu0 %v1555
    %v1557 = vpop.f32.mrf.mxu0
    %v1558 = vadd.f32 0.0, %v1557
    %v1559 = vand.u32 %v1432, 4294901760
    %v1560 = vsub.f32 %v1432, %v1559
    %v1561 = vand.u32 %v1560, 4294901760
    %v1562 = vsub.f32 %v1560, %v1561
    %v1563 = vand.u32 %v1562, 4294901760
    %1564 = vmatmul.f32.gmra.mxu0 %v1563
    %v1565 = vpop.f32.mrf.mxu0
    %v1566 = vadd.f32 0.0, %v1565
    %v1567 = vand.u32 %v1435, 4294901760
    %v1568 = vsub.f32 %v1435, %v1567
    %v1569 = vand.u32 %v1568, 4294901760
    %v1570 = vsub.f32 %v1568, %v1569
    %v1571 = vand.u32 %v1570, 4294901760
    %1572 = vmatmul.f32.gmra.mxu0 %v1571
    %v1573 = vpop.f32.mrf.mxu0
    %v1574 = vadd.f32 0.0, %v1573
    %v1575 = vand.u32 %v1438, 4294901760
    %v1576 = vsub.f32 %v1438, %v1575
    %v1577 = vand.u32 %v1576, 4294901760
    %v1578 = vsub.f32 %v1576, %v1577
    %v1579 = vand.u32 %v1578, 4294901760
    %1580 = vmatmul.f32.gmra.mxu0 %v1579
    %v1581 = vpop.f32.mrf.mxu0
    %v1582 = vadd.f32 0.0, %v1581
    %v1583 = vand.u32 %v1441, 4294901760
    %v1584 = vsub.f32 %v1441, %v1583
    %v1585 = vand.u32 %v1584, 4294901760
    %v1586 = vsub.f32 %v1584, %v1585
    %v1587 = vand.u32 %v1586, 4294901760
    %1588 = vmatmul.f32.gmra.mxu0 %v1587
    %v1589 = vpop.f32.mrf.mxu0
    %v1590 = vadd.f32 0.0, %v1589
    %1591 = vdwg.mxu0
    %1592 = vmatpush.msra.mxu0 0.0
    %1593 = vmatpush.msra.mxu0 0.0
    %1594 = vmatpush.msra.mxu0 0.0
    %1595 = vmatpush.msra.mxu0 0.0
    %1596 = vmatpush.msra.mxu0 0.0
    %1597 = vmatpush.msra.mxu0 0.0
    %1598 = vmatpush.msra.mxu0 0.0
    %1599 = vmatpush.msra.mxu0 0.0
    %1600 = vmatpush.msra.mxu0 0.0
    %1601 = vmatpush.msra.mxu0 0.0
    %1602 = vmatpush.msra.mxu0 0.0
    %1603 = vmatpush.msra.mxu0 0.0
    %v1604 = vand.u32 %v1392, 4294901760
    %v1605 = vsub.f32 %v1392, %v1604
    %v1606 = vand.u32 %v1605, 4294901760
    %v1607 = vsub.f32 %v1605, %v1606
    %v1608 = vand.u32 %v1607, 4294901760
    %1609 = vmatpush.msra.mxu0 %v1608
    %v1610 = vand.u32 %v1390, 4294901760
    %v1611 = vsub.f32 %v1390, %v1610
    %v1612 = vand.u32 %v1611, 4294901760
    %v1613 = vsub.f32 %v1611, %v1612
    %v1614 = vand.u32 %v1613, 4294901760
    %1615 = vmatpush.msra.mxu0 %v1614
    %v1616 = vand.u32 %v1388, 4294901760
    %v1617 = vsub.f32 %v1388, %v1616
    %v1618 = vand.u32 %v1617, 4294901760
    %v1619 = vsub.f32 %v1617, %v1618
    %v1620 = vand.u32 %v1619, 4294901760
    %1621 = vmatpush.msra.mxu0 %v1620
    %v1622 = vand.u32 %v1386, 4294901760
    %v1623 = vsub.f32 %v1386, %v1622
    %v1624 = vand.u32 %v1623, 4294901760
    %v1625 = vsub.f32 %v1623, %v1624
    %v1626 = vand.u32 %v1625, 4294901760
    %1627 = vmatpush.msra.mxu0 %v1626
    %v1628 = vand.u32 %v1396, 4294901760
    %1629 = vmatmul.f32.gmra.mxu0 %v1628
    %v1630 = vpop.f32.mrf.mxu0
    %v1631 = vadd.f32 %v1470, %v1630
    %v1632 = vand.u32 %v1399, 4294901760
    %1633 = vmatmul.f32.gmra.mxu0 %v1632
    %v1634 = vpop.f32.mrf.mxu0
    %v1635 = vadd.f32 %v1478, %v1634
    %v1636 = vand.u32 %v1402, 4294901760
    %1637 = vmatmul.f32.gmra.mxu0 %v1636
    %v1638 = vpop.f32.mrf.mxu0
    %v1639 = vadd.f32 %v1486, %v1638
    %v1640 = vand.u32 %v1405, 4294901760
    %1641 = vmatmul.f32.gmra.mxu0 %v1640
    %v1642 = vpop.f32.mrf.mxu0
    %v1643 = vadd.f32 %v1494, %v1642
    %v1644 = vand.u32 %v1408, 4294901760
    %1645 = vmatmul.f32.gmra.mxu0 %v1644
    %v1646 = vpop.f32.mrf.mxu0
    %v1647 = vadd.f32 %v1502, %v1646
    %v1648 = vand.u32 %v1411, 4294901760
    %1649 = vmatmul.f32.gmra.mxu0 %v1648
    %v1650 = vpop.f32.mrf.mxu0
    %v1651 = vadd.f32 %v1510, %v1650
    %v1652 = vand.u32 %v1414, 4294901760
    %1653 = vmatmul.f32.gmra.mxu0 %v1652
    %v1654 = vpop.f32.mrf.mxu0
    %v1655 = vadd.f32 %v1518, %v1654
    %v1656 = vand.u32 %v1417, 4294901760
    %1657 = vmatmul.f32.gmra.mxu0 %v1656
    %v1658 = vpop.f32.mrf.mxu0
    %v1659 = vadd.f32 %v1526, %v1658
    %v1660 = vand.u32 %v1420, 4294901760
    %1661 = vmatmul.f32.gmra.mxu0 %v1660
    %v1662 = vpop.f32.mrf.mxu0
    %v1663 = vadd.f32 %v1534, %v1662
    %v1664 = vand.u32 %v1423, 4294901760
    %1665 = vmatmul.f32.gmra.mxu0 %v1664
    %v1666 = vpop.f32.mrf.mxu0
    %v1667 = vadd.f32 %v1542, %v1666
    %v1668 = vand.u32 %v1426, 4294901760
    %1669 = vmatmul.f32.gmra.mxu0 %v1668
    %v1670 = vpop.f32.mrf.mxu0
    %v1671 = vadd.f32 %v1550, %v1670
    %v1672 = vand.u32 %v1429, 4294901760
    %1673 = vmatmul.f32.gmra.mxu0 %v1672
    %v1674 = vpop.f32.mrf.mxu0
    %v1675 = vadd.f32 %v1558, %v1674
    %v1676 = vand.u32 %v1432, 4294901760
    %1677 = vmatmul.f32.gmra.mxu0 %v1676
    %v1678 = vpop.f32.mrf.mxu0
    %v1679 = vadd.f32 %v1566, %v1678
    %v1680 = vand.u32 %v1435, 4294901760
    %1681 = vmatmul.f32.gmra.mxu0 %v1680
    %v1682 = vpop.f32.mrf.mxu0
    %v1683 = vadd.f32 %v1574, %v1682
    %v1684 = vand.u32 %v1438, 4294901760
    %1685 = vmatmul.f32.gmra.mxu0 %v1684
    %v1686 = vpop.f32.mrf.mxu0
    %v1687 = vadd.f32 %v1582, %v1686
    %v1688 = vand.u32 %v1441, 4294901760
    %1689 = vmatmul.f32.gmra.mxu0 %v1688
    %v1690 = vpop.f32.mrf.mxu0
    %v1691 = vadd.f32 %v1590, %v1690
    %1692 = vdwg.mxu0
    %1693 = vmatpush.msra.mxu0 0.0
    %1694 = vmatpush.msra.mxu0 0.0
    %1695 = vmatpush.msra.mxu0 0.0
    %1696 = vmatpush.msra.mxu0 0.0
    %1697 = vmatpush.msra.mxu0 0.0
    %1698 = vmatpush.msra.mxu0 0.0
    %1699 = vmatpush.msra.mxu0 0.0
    %1700 = vmatpush.msra.mxu0 0.0
    %1701 = vmatpush.msra.mxu0 0.0
    %1702 = vmatpush.msra.mxu0 0.0
    %1703 = vmatpush.msra.mxu0 0.0
    %1704 = vmatpush.msra.mxu0 0.0
    %v1705 = vand.u32 %v1392, 4294901760
    %v1706 = vsub.f32 %v1392, %v1705
    %1707 = vmatpush.msra.mxu0 %v1706
    %v1708 = vand.u32 %v1390, 4294901760
    %v1709 = vsub.f32 %v1390, %v1708
    %1710 = vmatpush.msra.mxu0 %v1709
    %v1711 = vand.u32 %v1388, 4294901760
    %v1712 = vsub.f32 %v1388, %v1711
    %1713 = vmatpush.msra.mxu0 %v1712
    %v1714 = vand.u32 %v1386, 4294901760
    %v1715 = vsub.f32 %v1386, %v1714
    %1716 = vmatpush.msra.mxu0 %v1715
    %v1717 = vand.u32 %v1396, 4294901760
    %v1718 = vsub.f32 %v1396, %v1717
    %1719 = vmatmul.f32.gmra.mxu0 %v1718
    %v1720 = vpop.f32.mrf.mxu0
    %v1721 = vadd.f32 %v1631, %v1720
    %v1722 = vand.u32 %v1399, 4294901760
    %v1723 = vsub.f32 %v1399, %v1722
    %1724 = vmatmul.f32.gmra.mxu0 %v1723
    %v1725 = vpop.f32.mrf.mxu0
    %v1726 = vadd.f32 %v1635, %v1725
    %v1727 = vand.u32 %v1402, 4294901760
    %v1728 = vsub.f32 %v1402, %v1727
    %1729 = vmatmul.f32.gmra.mxu0 %v1728
    %v1730 = vpop.f32.mrf.mxu0
    %v1731 = vadd.f32 %v1639, %v1730
    %v1732 = vand.u32 %v1405, 4294901760
    %v1733 = vsub.f32 %v1405, %v1732
    %1734 = vmatmul.f32.gmra.mxu0 %v1733
    %v1735 = vpop.f32.mrf.mxu0
    %v1736 = vadd.f32 %v1643, %v1735
    %v1737 = vand.u32 %v1408, 4294901760
    %v1738 = vsub.f32 %v1408, %v1737
    %1739 = vmatmul.f32.gmra.mxu0 %v1738
    %v1740 = vpop.f32.mrf.mxu0
    %v1741 = vadd.f32 %v1647, %v1740
    %v1742 = vand.u32 %v1411, 4294901760
    %v1743 = vsub.f32 %v1411, %v1742
    %1744 = vmatmul.f32.gmra.mxu0 %v1743
    %v1745 = vpop.f32.mrf.mxu0
    %v1746 = vadd.f32 %v1651, %v1745
    %v1747 = vand.u32 %v1414, 4294901760
    %v1748 = vsub.f32 %v1414, %v1747
    %1749 = vmatmul.f32.gmra.mxu0 %v1748
    %v1750 = vpop.f32.mrf.mxu0
    %v1751 = vadd.f32 %v1655, %v1750
    %v1752 = vand.u32 %v1417, 4294901760
    %v1753 = vsub.f32 %v1417, %v1752
    %1754 = vmatmul.f32.gmra.mxu0 %v1753
    %v1755 = vpop.f32.mrf.mxu0
    %v1756 = vadd.f32 %v1659, %v1755
    %v1757 = vand.u32 %v1420, 4294901760
    %v1758 = vsub.f32 %v1420, %v1757
    %1759 = vmatmul.f32.gmra.mxu0 %v1758
    %v1760 = vpop.f32.mrf.mxu0
    %v1761 = vadd.f32 %v1663, %v1760
    %v1762 = vand.u32 %v1423, 4294901760
    %v1763 = vsub.f32 %v1423, %v1762
    %1764 = vmatmul.f32.gmra.mxu0 %v1763
    %v1765 = vpop.f32.mrf.mxu0
    %v1766 = vadd.f32 %v1667, %v1765
    %v1767 = vand.u32 %v1426, 4294901760
    %v1768 = vsub.f32 %v1426, %v1767
    %1769 = vmatmul.f32.gmra.mxu0 %v1768
    %v1770 = vpop.f32.mrf.mxu0
    %v1771 = vadd.f32 %v1671, %v1770
    %v1772 = vand.u32 %v1429, 4294901760
    %v1773 = vsub.f32 %v1429, %v1772
    %1774 = vmatmul.f32.gmra.mxu0 %v1773
    %v1775 = vpop.f32.mrf.mxu0
    %v1776 = vadd.f32 %v1675, %v1775
    %v1777 = vand.u32 %v1432, 4294901760
    %v1778 = vsub.f32 %v1432, %v1777
    %1779 = vmatmul.f32.gmra.mxu0 %v1778
    %v1780 = vpop.f32.mrf.mxu0
    %v1781 = vadd.f32 %v1679, %v1780
    %v1782 = vand.u32 %v1435, 4294901760
    %v1783 = vsub.f32 %v1435, %v1782
    %1784 = vmatmul.f32.gmra.mxu0 %v1783
    %v1785 = vpop.f32.mrf.mxu0
    %v1786 = vadd.f32 %v1683, %v1785
    %v1787 = vand.u32 %v1438, 4294901760
    %v1788 = vsub.f32 %v1438, %v1787
    %1789 = vmatmul.f32.gmra.mxu0 %v1788
    %v1790 = vpop.f32.mrf.mxu0
    %v1791 = vadd.f32 %v1687, %v1790
    %v1792 = vand.u32 %v1441, 4294901760
    %v1793 = vsub.f32 %v1441, %v1792
    %1794 = vmatmul.f32.gmra.mxu0 %v1793
    %v1795 = vpop.f32.mrf.mxu0
    %v1796 = vadd.f32 %v1691, %v1795
    %1797 = vdwg.mxu0
    %1798 = vmatpush.msra.mxu0 0.0
    %1799 = vmatpush.msra.mxu0 0.0
    %1800 = vmatpush.msra.mxu0 0.0
    %1801 = vmatpush.msra.mxu0 0.0
    %1802 = vmatpush.msra.mxu0 0.0
    %1803 = vmatpush.msra.mxu0 0.0
    %1804 = vmatpush.msra.mxu0 0.0
    %1805 = vmatpush.msra.mxu0 0.0
    %1806 = vmatpush.msra.mxu0 0.0
    %1807 = vmatpush.msra.mxu0 0.0
    %1808 = vmatpush.msra.mxu0 0.0
    %1809 = vmatpush.msra.mxu0 0.0
    %v1810 = vand.u32 %v1392, 4294901760
    %1811 = vmatpush.msra.mxu0 %v1810
    %v1812 = vand.u32 %v1390, 4294901760
    %1813 = vmatpush.msra.mxu0 %v1812
    %v1814 = vand.u32 %v1388, 4294901760
    %1815 = vmatpush.msra.mxu0 %v1814
    %v1816 = vand.u32 %v1386, 4294901760
    %1817 = vmatpush.msra.mxu0 %v1816
    %v1818 = vand.u32 %v1396, 4294901760
    %v1819 = vsub.f32 %v1396, %v1818
    %v1820 = vand.u32 %v1819, 4294901760
    %1821 = vmatmul.f32.gmra.mxu0 %v1820
    %v1822 = vpop.f32.mrf.mxu0
    %v1823 = vadd.f32 %v1721, %v1822
    %v1824 = vand.u32 %v1399, 4294901760
    %v1825 = vsub.f32 %v1399, %v1824
    %v1826 = vand.u32 %v1825, 4294901760
    %1827 = vmatmul.f32.gmra.mxu0 %v1826
    %v1828 = vpop.f32.mrf.mxu0
    %v1829 = vadd.f32 %v1726, %v1828
    %v1830 = vand.u32 %v1402, 4294901760
    %v1831 = vsub.f32 %v1402, %v1830
    %v1832 = vand.u32 %v1831, 4294901760
    %1833 = vmatmul.f32.gmra.mxu0 %v1832
    %v1834 = vpop.f32.mrf.mxu0
    %v1835 = vadd.f32 %v1731, %v1834
    %v1836 = vand.u32 %v1405, 4294901760
    %v1837 = vsub.f32 %v1405, %v1836
    %v1838 = vand.u32 %v1837, 4294901760
    %1839 = vmatmul.f32.gmra.mxu0 %v1838
    %v1840 = vpop.f32.mrf.mxu0
    %v1841 = vadd.f32 %v1736, %v1840
    %v1842 = vand.u32 %v1408, 4294901760
    %v1843 = vsub.f32 %v1408, %v1842
    %v1844 = vand.u32 %v1843, 4294901760
    %1845 = vmatmul.f32.gmra.mxu0 %v1844
    %v1846 = vpop.f32.mrf.mxu0
    %v1847 = vadd.f32 %v1741, %v1846
    %v1848 = vand.u32 %v1411, 4294901760
    %v1849 = vsub.f32 %v1411, %v1848
    %v1850 = vand.u32 %v1849, 4294901760
    %1851 = vmatmul.f32.gmra.mxu0 %v1850
    %v1852 = vpop.f32.mrf.mxu0
    %v1853 = vadd.f32 %v1746, %v1852
    %v1854 = vand.u32 %v1414, 4294901760
    %v1855 = vsub.f32 %v1414, %v1854
    %v1856 = vand.u32 %v1855, 4294901760
    %1857 = vmatmul.f32.gmra.mxu0 %v1856
    %v1858 = vpop.f32.mrf.mxu0
    %v1859 = vadd.f32 %v1751, %v1858
    %v1860 = vand.u32 %v1417, 4294901760
    %v1861 = vsub.f32 %v1417, %v1860
    %v1862 = vand.u32 %v1861, 4294901760
    %1863 = vmatmul.f32.gmra.mxu0 %v1862
    %v1864 = vpop.f32.mrf.mxu0
    %v1865 = vadd.f32 %v1756, %v1864
    %v1866 = vand.u32 %v1420, 4294901760
    %v1867 = vsub.f32 %v1420, %v1866
    %v1868 = vand.u32 %v1867, 4294901760
    %1869 = vmatmul.f32.gmra.mxu0 %v1868
    %v1870 = vpop.f32.mrf.mxu0
    %v1871 = vadd.f32 %v1761, %v1870
    %v1872 = vand.u32 %v1423, 4294901760
    %v1873 = vsub.f32 %v1423, %v1872
    %v1874 = vand.u32 %v1873, 4294901760
    %1875 = vmatmul.f32.gmra.mxu0 %v1874
    %v1876 = vpop.f32.mrf.mxu0
    %v1877 = vadd.f32 %v1766, %v1876
    %v1878 = vand.u32 %v1426, 4294901760
    %v1879 = vsub.f32 %v1426, %v1878
    %v1880 = vand.u32 %v1879, 4294901760
    %1881 = vmatmul.f32.gmra.mxu0 %v1880
    %v1882 = vpop.f32.mrf.mxu0
    %v1883 = vadd.f32 %v1771, %v1882
    %v1884 = vand.u32 %v1429, 4294901760
    %v1885 = vsub.f32 %v1429, %v1884
    %v1886 = vand.u32 %v1885, 4294901760
    %1887 = vmatmul.f32.gmra.mxu0 %v1886
    %v1888 = vpop.f32.mrf.mxu0
    %v1889 = vadd.f32 %v1776, %v1888
    %v1890 = vand.u32 %v1432, 4294901760
    %v1891 = vsub.f32 %v1432, %v1890
    %v1892 = vand.u32 %v1891, 4294901760
    %1893 = vmatmul.f32.gmra.mxu0 %v1892
    %v1894 = vpop.f32.mrf.mxu0
    %v1895 = vadd.f32 %v1781, %v1894
    %v1896 = vand.u32 %v1435, 4294901760
    %v1897 = vsub.f32 %v1435, %v1896
    %v1898 = vand.u32 %v1897, 4294901760
    %1899 = vmatmul.f32.gmra.mxu0 %v1898
    %v1900 = vpop.f32.mrf.mxu0
    %v1901 = vadd.f32 %v1786, %v1900
    %v1902 = vand.u32 %v1438, 4294901760
    %v1903 = vsub.f32 %v1438, %v1902
    %v1904 = vand.u32 %v1903, 4294901760
    %1905 = vmatmul.f32.gmra.mxu0 %v1904
    %v1906 = vpop.f32.mrf.mxu0
    %v1907 = vadd.f32 %v1791, %v1906
    %v1908 = vand.u32 %v1441, 4294901760
    %v1909 = vsub.f32 %v1441, %v1908
    %v1910 = vand.u32 %v1909, 4294901760
    %1911 = vmatmul.f32.gmra.mxu0 %v1910
    %v1912 = vpop.f32.mrf.mxu0
    %v1913 = vadd.f32 %v1796, %v1912
    %1914 = vdwg.mxu0
    %1915 = vmatpush.msra.mxu0 0.0
    %1916 = vmatpush.msra.mxu0 0.0
    %1917 = vmatpush.msra.mxu0 0.0
    %1918 = vmatpush.msra.mxu0 0.0
    %1919 = vmatpush.msra.mxu0 0.0
    %1920 = vmatpush.msra.mxu0 0.0
    %1921 = vmatpush.msra.mxu0 0.0
    %1922 = vmatpush.msra.mxu0 0.0
    %1923 = vmatpush.msra.mxu0 0.0
    %1924 = vmatpush.msra.mxu0 0.0
    %1925 = vmatpush.msra.mxu0 0.0
    %1926 = vmatpush.msra.mxu0 0.0
    %v1927 = vand.u32 %v1392, 4294901760
    %v1928 = vsub.f32 %v1392, %v1927
    %v1929 = vand.u32 %v1928, 4294901760
    %1930 = vmatpush.msra.mxu0 %v1929
    %v1931 = vand.u32 %v1390, 4294901760
    %v1932 = vsub.f32 %v1390, %v1931
    %v1933 = vand.u32 %v1932, 4294901760
    %1934 = vmatpush.msra.mxu0 %v1933
    %v1935 = vand.u32 %v1388, 4294901760
    %v1936 = vsub.f32 %v1388, %v1935
    %v1937 = vand.u32 %v1936, 4294901760
    %1938 = vmatpush.msra.mxu0 %v1937
    %v1939 = vand.u32 %v1386, 4294901760
    %v1940 = vsub.f32 %v1386, %v1939
    %v1941 = vand.u32 %v1940, 4294901760
    %1942 = vmatpush.msra.mxu0 %v1941
    %v1943 = vand.u32 %v1396, 4294901760
    %1944 = vmatmul.f32.gmra.mxu0 %v1943
    %v1945 = vpop.f32.mrf.mxu0
    %v1946 = vadd.f32 %v1823, %v1945
    %v1947 = vand.u32 %v1399, 4294901760
    %1948 = vmatmul.f32.gmra.mxu0 %v1947
    %v1949 = vpop.f32.mrf.mxu0
    %v1950 = vadd.f32 %v1829, %v1949
    %v1951 = vand.u32 %v1402, 4294901760
    %1952 = vmatmul.f32.gmra.mxu0 %v1951
    %v1953 = vpop.f32.mrf.mxu0
    %v1954 = vadd.f32 %v1835, %v1953
    %v1955 = vand.u32 %v1405, 4294901760
    %1956 = vmatmul.f32.gmra.mxu0 %v1955
    %v1957 = vpop.f32.mrf.mxu0
    %v1958 = vadd.f32 %v1841, %v1957
    %v1959 = vand.u32 %v1408, 4294901760
    %1960 = vmatmul.f32.gmra.mxu0 %v1959
    %v1961 = vpop.f32.mrf.mxu0
    %v1962 = vadd.f32 %v1847, %v1961
    %v1963 = vand.u32 %v1411, 4294901760
    %1964 = vmatmul.f32.gmra.mxu0 %v1963
    %v1965 = vpop.f32.mrf.mxu0
    %v1966 = vadd.f32 %v1853, %v1965
    %v1967 = vand.u32 %v1414, 4294901760
    %1968 = vmatmul.f32.gmra.mxu0 %v1967
    %v1969 = vpop.f32.mrf.mxu0
    %v1970 = vadd.f32 %v1859, %v1969
    %v1971 = vand.u32 %v1417, 4294901760
    %1972 = vmatmul.f32.gmra.mxu0 %v1971
    %v1973 = vpop.f32.mrf.mxu0
    %v1974 = vadd.f32 %v1865, %v1973
    %v1975 = vand.u32 %v1420, 4294901760
    %1976 = vmatmul.f32.gmra.mxu0 %v1975
    %v1977 = vpop.f32.mrf.mxu0
    %v1978 = vadd.f32 %v1871, %v1977
    %v1979 = vand.u32 %v1423, 4294901760
    %1980 = vmatmul.f32.gmra.mxu0 %v1979
    %v1981 = vpop.f32.mrf.mxu0
    %v1982 = vadd.f32 %v1877, %v1981
    %v1983 = vand.u32 %v1426, 4294901760
    %1984 = vmatmul.f32.gmra.mxu0 %v1983
    %v1985 = vpop.f32.mrf.mxu0
    %v1986 = vadd.f32 %v1883, %v1985
    %v1987 = vand.u32 %v1429, 4294901760
    %1988 = vmatmul.f32.gmra.mxu0 %v1987
    %v1989 = vpop.f32.mrf.mxu0
    %v1990 = vadd.f32 %v1889, %v1989
    %v1991 = vand.u32 %v1432, 4294901760
    %1992 = vmatmul.f32.gmra.mxu0 %v1991
    %v1993 = vpop.f32.mrf.mxu0
    %v1994 = vadd.f32 %v1895, %v1993
    %v1995 = vand.u32 %v1435, 4294901760
    %1996 = vmatmul.f32.gmra.mxu0 %v1995
    %v1997 = vpop.f32.mrf.mxu0
    %v1998 = vadd.f32 %v1901, %v1997
    %v1999 = vand.u32 %v1438, 4294901760
    %2000 = vmatmul.f32.gmra.mxu0 %v1999
    %v2001 = vpop.f32.mrf.mxu0
    %v2002 = vadd.f32 %v1907, %v2001
    %v2003 = vand.u32 %v1441, 4294901760
    %2004 = vmatmul.f32.gmra.mxu0 %v2003
    %v2005 = vpop.f32.mrf.mxu0
    %v2006 = vadd.f32 %v1913, %v2005
    %2007 = vdwg.mxu0
    %2008 = vmatpush.msra.mxu0 0.0
    %2009 = vmatpush.msra.mxu0 0.0
    %2010 = vmatpush.msra.mxu0 0.0
    %2011 = vmatpush.msra.mxu0 0.0
    %2012 = vmatpush.msra.mxu0 0.0
    %2013 = vmatpush.msra.mxu0 0.0
    %2014 = vmatpush.msra.mxu0 0.0
    %2015 = vmatpush.msra.mxu0 0.0
    %2016 = vmatpush.msra.mxu0 0.0
    %2017 = vmatpush.msra.mxu0 0.0
    %2018 = vmatpush.msra.mxu0 0.0
    %2019 = vmatpush.msra.mxu0 0.0
    %v2020 = vand.u32 %v1392, 4294901760
    %2021 = vmatpush.msra.mxu0 %v2020
    %v2022 = vand.u32 %v1390, 4294901760
    %2023 = vmatpush.msra.mxu0 %v2022
    %v2024 = vand.u32 %v1388, 4294901760
    %2025 = vmatpush.msra.mxu0 %v2024
    %v2026 = vand.u32 %v1386, 4294901760
    %2027 = vmatpush.msra.mxu0 %v2026
    %v2028 = vand.u32 %v1396, 4294901760
    %2029 = vmatmul.f32.gmra.mxu0 %v2028
    %v2030 = vpop.f32.mrf.mxu0
    %v2031 = vadd.f32 %v1946, %v2030
    %v2032 = vand.u32 %v1399, 4294901760
    %2033 = vmatmul.f32.gmra.mxu0 %v2032
    %v2034 = vpop.f32.mrf.mxu0
    %v2035 = vadd.f32 %v1950, %v2034
    %v2036 = vand.u32 %v1402, 4294901760
    %2037 = vmatmul.f32.gmra.mxu0 %v2036
    %v2038 = vpop.f32.mrf.mxu0
    %v2039 = vadd.f32 %v1954, %v2038
    %v2040 = vand.u32 %v1405, 4294901760
    %2041 = vmatmul.f32.gmra.mxu0 %v2040
    %v2042 = vpop.f32.mrf.mxu0
    %v2043 = vadd.f32 %v1958, %v2042
    %v2044 = vand.u32 %v1408, 4294901760
    %2045 = vmatmul.f32.gmra.mxu0 %v2044
    %v2046 = vpop.f32.mrf.mxu0
    %v2047 = vadd.f32 %v1962, %v2046
    %v2048 = vand.u32 %v1411, 4294901760
    %2049 = vmatmul.f32.gmra.mxu0 %v2048
    %v2050 = vpop.f32.mrf.mxu0
    %v2051 = vadd.f32 %v1966, %v2050
    %v2052 = vand.u32 %v1414, 4294901760
    %2053 = vmatmul.f32.gmra.mxu0 %v2052
    %v2054 = vpop.f32.mrf.mxu0
    %v2055 = vadd.f32 %v1970, %v2054
    %v2056 = vand.u32 %v1417, 4294901760
    %2057 = vmatmul.f32.gmra.mxu0 %v2056
    %v2058 = vpop.f32.mrf.mxu0
    %v2059 = vadd.f32 %v1974, %v2058
    %v2060 = vand.u32 %v1420, 4294901760
    %2061 = vmatmul.f32.gmra.mxu0 %v2060
    %v2062 = vpop.f32.mrf.mxu0
    %v2063 = vadd.f32 %v1978, %v2062
    %v2064 = vand.u32 %v1423, 4294901760
    %2065 = vmatmul.f32.gmra.mxu0 %v2064
    %v2066 = vpop.f32.mrf.mxu0
    %v2067 = vadd.f32 %v1982, %v2066
    %v2068 = vand.u32 %v1426, 4294901760
    %2069 = vmatmul.f32.gmra.mxu0 %v2068
    %v2070 = vpop.f32.mrf.mxu0
    %v2071 = vadd.f32 %v1986, %v2070
    %v2072 = vand.u32 %v1429, 4294901760
    %2073 = vmatmul.f32.gmra.mxu0 %v2072
    %v2074 = vpop.f32.mrf.mxu0
    %v2075 = vadd.f32 %v1990, %v2074
    %v2076 = vand.u32 %v1432, 4294901760
    %2077 = vmatmul.f32.gmra.mxu0 %v2076
    %v2078 = vpop.f32.mrf.mxu0
    %v2079 = vadd.f32 %v1994, %v2078
    %v2080 = vand.u32 %v1435, 4294901760
    %2081 = vmatmul.f32.gmra.mxu0 %v2080
    %v2082 = vpop.f32.mrf.mxu0
    %v2083 = vadd.f32 %v1998, %v2082
    %v2084 = vand.u32 %v1438, 4294901760
    %2085 = vmatmul.f32.gmra.mxu0 %v2084
    %v2086 = vpop.f32.mrf.mxu0
    %v2087 = vadd.f32 %v2002, %v2086
    %v2088 = vand.u32 %v1441, 4294901760
    %2089 = vmatmul.f32.gmra.mxu0 %v2088
    %v2090 = vpop.f32.mrf.mxu0
    %v2091 = vadd.f32 %v2006, %v2090
    %2092 = vdwg.mxu0
    %2093 = vmatpush.msra.mxu0 0.0
    %2094 = vmatpush.msra.mxu0 0.0
    %2095 = vmatpush.msra.mxu0 0.0
    %2096 = vmatpush.msra.mxu0 0.0
    %2097 = vmatpush.msra.mxu0 0.0
    %2098 = vmatpush.msra.mxu0 0.0
    %2099 = vmatpush.msra.mxu0 0.0
    %2100 = vmatpush.msra.mxu0 0.0
    %2101 = vmatpush.msra.mxu0 0.0
    %2102 = vmatpush.msra.mxu0 0.0
    %2103 = vmatpush.msra.mxu0 0.0
    %2104 = vmatpush.msra.mxu0 0.0
    %v2105 = vand.u32 %v1393, 4294901760
    %2106 = vmatpush.msra.mxu0 %v2105
    %v2107 = vand.u32 %v1391, 4294901760
    %2108 = vmatpush.msra.mxu0 %v2107
    %v2109 = vand.u32 %v1389, 4294901760
    %2110 = vmatpush.msra.mxu0 %v2109
    %v2111 = vand.u32 %v1387, 4294901760
    %2112 = vmatpush.msra.mxu0 %v2111
    %v2113 = vand.u32 %v1396, 4294901760
    %v2114 = vsub.f32 %v1396, %v2113
    %v2115 = vand.u32 %v2114, 4294901760
    %v2116 = vsub.f32 %v2114, %v2115
    %v2117 = vand.u32 %v2116, 4294901760
    %2118 = vmatmul.f32.gmra.mxu0 %v2117
    %v2119 = vpop.f32.mrf.mxu0
    %v2120 = vadd.f32 0.0, %v2119
    %v2121 = vand.u32 %v1399, 4294901760
    %v2122 = vsub.f32 %v1399, %v2121
    %v2123 = vand.u32 %v2122, 4294901760
    %v2124 = vsub.f32 %v2122, %v2123
    %v2125 = vand.u32 %v2124, 4294901760
    %2126 = vmatmul.f32.gmra.mxu0 %v2125
    %v2127 = vpop.f32.mrf.mxu0
    %v2128 = vadd.f32 0.0, %v2127
    %v2129 = vand.u32 %v1402, 4294901760
    %v2130 = vsub.f32 %v1402, %v2129
    %v2131 = vand.u32 %v2130, 4294901760
    %v2132 = vsub.f32 %v2130, %v2131
    %v2133 = vand.u32 %v2132, 4294901760
    %2134 = vmatmul.f32.gmra.mxu0 %v2133
    %v2135 = vpop.f32.mrf.mxu0
    %v2136 = vadd.f32 0.0, %v2135
    %v2137 = vand.u32 %v1405, 4294901760
    %v2138 = vsub.f32 %v1405, %v2137
    %v2139 = vand.u32 %v2138, 4294901760
    %v2140 = vsub.f32 %v2138, %v2139
    %v2141 = vand.u32 %v2140, 4294901760
    %2142 = vmatmul.f32.gmra.mxu0 %v2141
    %v2143 = vpop.f32.mrf.mxu0
    %v2144 = vadd.f32 0.0, %v2143
    %v2145 = vand.u32 %v1408, 4294901760
    %v2146 = vsub.f32 %v1408, %v2145
    %v2147 = vand.u32 %v2146, 4294901760
    %v2148 = vsub.f32 %v2146, %v2147
    %v2149 = vand.u32 %v2148, 4294901760
    %2150 = vmatmul.f32.gmra.mxu0 %v2149
    %v2151 = vpop.f32.mrf.mxu0
    %v2152 = vadd.f32 0.0, %v2151
    %v2153 = vand.u32 %v1411, 4294901760
    %v2154 = vsub.f32 %v1411, %v2153
    %v2155 = vand.u32 %v2154, 4294901760
    %v2156 = vsub.f32 %v2154, %v2155
    %v2157 = vand.u32 %v2156, 4294901760
    %2158 = vmatmul.f32.gmra.mxu0 %v2157
    %v2159 = vpop.f32.mrf.mxu0
    %v2160 = vadd.f32 0.0, %v2159
    %v2161 = vand.u32 %v1414, 4294901760
    %v2162 = vsub.f32 %v1414, %v2161
    %v2163 = vand.u32 %v2162, 4294901760
    %v2164 = vsub.f32 %v2162, %v2163
    %v2165 = vand.u32 %v2164, 4294901760
    %2166 = vmatmul.f32.gmra.mxu0 %v2165
    %v2167 = vpop.f32.mrf.mxu0
    %v2168 = vadd.f32 0.0, %v2167
    %v2169 = vand.u32 %v1417, 4294901760
    %v2170 = vsub.f32 %v1417, %v2169
    %v2171 = vand.u32 %v2170, 4294901760
    %v2172 = vsub.f32 %v2170, %v2171
    %v2173 = vand.u32 %v2172, 4294901760
    %2174 = vmatmul.f32.gmra.mxu0 %v2173
    %v2175 = vpop.f32.mrf.mxu0
    %v2176 = vadd.f32 0.0, %v2175
    %v2177 = vand.u32 %v1420, 4294901760
    %v2178 = vsub.f32 %v1420, %v2177
    %v2179 = vand.u32 %v2178, 4294901760
    %v2180 = vsub.f32 %v2178, %v2179
    %v2181 = vand.u32 %v2180, 4294901760
    %2182 = vmatmul.f32.gmra.mxu0 %v2181
    %v2183 = vpop.f32.mrf.mxu0
    %v2184 = vadd.f32 0.0, %v2183
    %v2185 = vand.u32 %v1423, 4294901760
    %v2186 = vsub.f32 %v1423, %v2185
    %v2187 = vand.u32 %v2186, 4294901760
    %v2188 = vsub.f32 %v2186, %v2187
    %v2189 = vand.u32 %v2188, 4294901760
    %2190 = vmatmul.f32.gmra.mxu0 %v2189
    %v2191 = vpop.f32.mrf.mxu0
    %v2192 = vadd.f32 0.0, %v2191
    %v2193 = vand.u32 %v1426, 4294901760
    %v2194 = vsub.f32 %v1426, %v2193
    %v2195 = vand.u32 %v2194, 4294901760
    %v2196 = vsub.f32 %v2194, %v2195
    %v2197 = vand.u32 %v2196, 4294901760
    %2198 = vmatmul.f32.gmra.mxu0 %v2197
    %v2199 = vpop.f32.mrf.mxu0
    %v2200 = vadd.f32 0.0, %v2199
    %v2201 = vand.u32 %v1429, 4294901760
    %v2202 = vsub.f32 %v1429, %v2201
    %v2203 = vand.u32 %v2202, 4294901760
    %v2204 = vsub.f32 %v2202, %v2203
    %v2205 = vand.u32 %v2204, 4294901760
    %2206 = vmatmul.f32.gmra.mxu0 %v2205
    %v2207 = vpop.f32.mrf.mxu0
    %v2208 = vadd.f32 0.0, %v2207
    %v2209 = vand.u32 %v1432, 4294901760
    %v2210 = vsub.f32 %v1432, %v2209
    %v2211 = vand.u32 %v2210, 4294901760
    %v2212 = vsub.f32 %v2210, %v2211
    %v2213 = vand.u32 %v2212, 4294901760
    %2214 = vmatmul.f32.gmra.mxu0 %v2213
    %v2215 = vpop.f32.mrf.mxu0
    %v2216 = vadd.f32 0.0, %v2215
    %v2217 = vand.u32 %v1435, 4294901760
    %v2218 = vsub.f32 %v1435, %v2217
    %v2219 = vand.u32 %v2218, 4294901760
    %v2220 = vsub.f32 %v2218, %v2219
    %v2221 = vand.u32 %v2220, 4294901760
    %2222 = vmatmul.f32.gmra.mxu0 %v2221
    %v2223 = vpop.f32.mrf.mxu0
    %v2224 = vadd.f32 0.0, %v2223
    %v2225 = vand.u32 %v1438, 4294901760
    %v2226 = vsub.f32 %v1438, %v2225
    %v2227 = vand.u32 %v2226, 4294901760
    %v2228 = vsub.f32 %v2226, %v2227
    %v2229 = vand.u32 %v2228, 4294901760
    %2230 = vmatmul.f32.gmra.mxu0 %v2229
    %v2231 = vpop.f32.mrf.mxu0
    %v2232 = vadd.f32 0.0, %v2231
    %v2233 = vand.u32 %v1441, 4294901760
    %v2234 = vsub.f32 %v1441, %v2233
    %v2235 = vand.u32 %v2234, 4294901760
    %v2236 = vsub.f32 %v2234, %v2235
    %v2237 = vand.u32 %v2236, 4294901760
    %2238 = vmatmul.f32.gmra.mxu0 %v2237
    %v2239 = vpop.f32.mrf.mxu0
    %v2240 = vadd.f32 0.0, %v2239
    %2241 = vdwg.mxu0
    %2242 = vmatpush.msra.mxu0 0.0
    %2243 = vmatpush.msra.mxu0 0.0
    %2244 = vmatpush.msra.mxu0 0.0
    %2245 = vmatpush.msra.mxu0 0.0
    %2246 = vmatpush.msra.mxu0 0.0
    %2247 = vmatpush.msra.mxu0 0.0
    %2248 = vmatpush.msra.mxu0 0.0
    %2249 = vmatpush.msra.mxu0 0.0
    %2250 = vmatpush.msra.mxu0 0.0
    %2251 = vmatpush.msra.mxu0 0.0
    %2252 = vmatpush.msra.mxu0 0.0
    %2253 = vmatpush.msra.mxu0 0.0
    %v2254 = vand.u32 %v1393, 4294901760
    %v2255 = vsub.f32 %v1393, %v2254
    %v2256 = vand.u32 %v2255, 4294901760
    %v2257 = vsub.f32 %v2255, %v2256
    %v2258 = vand.u32 %v2257, 4294901760
    %2259 = vmatpush.msra.mxu0 %v2258
    %v2260 = vand.u32 %v1391, 4294901760
    %v2261 = vsub.f32 %v1391, %v2260
    %v2262 = vand.u32 %v2261, 4294901760
    %v2263 = vsub.f32 %v2261, %v2262
    %v2264 = vand.u32 %v2263, 4294901760
    %2265 = vmatpush.msra.mxu0 %v2264
    %v2266 = vand.u32 %v1389, 4294901760
    %v2267 = vsub.f32 %v1389, %v2266
    %v2268 = vand.u32 %v2267, 4294901760
    %v2269 = vsub.f32 %v2267, %v2268
    %v2270 = vand.u32 %v2269, 4294901760
    %2271 = vmatpush.msra.mxu0 %v2270
    %v2272 = vand.u32 %v1387, 4294901760
    %v2273 = vsub.f32 %v1387, %v2272
    %v2274 = vand.u32 %v2273, 4294901760
    %v2275 = vsub.f32 %v2273, %v2274
    %v2276 = vand.u32 %v2275, 4294901760
    %2277 = vmatpush.msra.mxu0 %v2276
    %v2278 = vand.u32 %v1396, 4294901760
    %2279 = vmatmul.f32.gmra.mxu0 %v2278
    %v2280 = vpop.f32.mrf.mxu0
    %v2281 = vadd.f32 %v2120, %v2280
    %v2282 = vand.u32 %v1399, 4294901760
    %2283 = vmatmul.f32.gmra.mxu0 %v2282
    %v2284 = vpop.f32.mrf.mxu0
    %v2285 = vadd.f32 %v2128, %v2284
    %v2286 = vand.u32 %v1402, 4294901760
    %2287 = vmatmul.f32.gmra.mxu0 %v2286
    %v2288 = vpop.f32.mrf.mxu0
    %v2289 = vadd.f32 %v2136, %v2288
    %v2290 = vand.u32 %v1405, 4294901760
    %2291 = vmatmul.f32.gmra.mxu0 %v2290
    %v2292 = vpop.f32.mrf.mxu0
    %v2293 = vadd.f32 %v2144, %v2292
    %v2294 = vand.u32 %v1408, 4294901760
    %2295 = vmatmul.f32.gmra.mxu0 %v2294
    %v2296 = vpop.f32.mrf.mxu0
    %v2297 = vadd.f32 %v2152, %v2296
    %v2298 = vand.u32 %v1411, 4294901760
    %2299 = vmatmul.f32.gmra.mxu0 %v2298
    %v2300 = vpop.f32.mrf.mxu0
    %v2301 = vadd.f32 %v2160, %v2300
    %v2302 = vand.u32 %v1414, 4294901760
    %2303 = vmatmul.f32.gmra.mxu0 %v2302
    %v2304 = vpop.f32.mrf.mxu0
    %v2305 = vadd.f32 %v2168, %v2304
    %v2306 = vand.u32 %v1417, 4294901760
    %2307 = vmatmul.f32.gmra.mxu0 %v2306
    %v2308 = vpop.f32.mrf.mxu0
    %v2309 = vadd.f32 %v2176, %v2308
    %v2310 = vand.u32 %v1420, 4294901760
    %2311 = vmatmul.f32.gmra.mxu0 %v2310
    %v2312 = vpop.f32.mrf.mxu0
    %v2313 = vadd.f32 %v2184, %v2312
    %v2314 = vand.u32 %v1423, 4294901760
    %2315 = vmatmul.f32.gmra.mxu0 %v2314
    %v2316 = vpop.f32.mrf.mxu0
    %v2317 = vadd.f32 %v2192, %v2316
    %v2318 = vand.u32 %v1426, 4294901760
    %2319 = vmatmul.f32.gmra.mxu0 %v2318
    %v2320 = vpop.f32.mrf.mxu0
    %v2321 = vadd.f32 %v2200, %v2320
    %v2322 = vand.u32 %v1429, 4294901760
    %2323 = vmatmul.f32.gmra.mxu0 %v2322
    %v2324 = vpop.f32.mrf.mxu0
    %v2325 = vadd.f32 %v2208, %v2324
    %v2326 = vand.u32 %v1432, 4294901760
    %2327 = vmatmul.f32.gmra.mxu0 %v2326
    %v2328 = vpop.f32.mrf.mxu0
    %v2329 = vadd.f32 %v2216, %v2328
    %v2330 = vand.u32 %v1435, 4294901760
    %2331 = vmatmul.f32.gmra.mxu0 %v2330
    %v2332 = vpop.f32.mrf.mxu0
    %v2333 = vadd.f32 %v2224, %v2332
    %v2334 = vand.u32 %v1438, 4294901760
    %2335 = vmatmul.f32.gmra.mxu0 %v2334
    %v2336 = vpop.f32.mrf.mxu0
    %v2337 = vadd.f32 %v2232, %v2336
    %v2338 = vand.u32 %v1441, 4294901760
    %2339 = vmatmul.f32.gmra.mxu0 %v2338
    %v2340 = vpop.f32.mrf.mxu0
    %v2341 = vadd.f32 %v2240, %v2340
    %2342 = vdwg.mxu0
    %2343 = vmatpush.msra.mxu0 0.0
    %2344 = vmatpush.msra.mxu0 0.0
    %2345 = vmatpush.msra.mxu0 0.0
    %2346 = vmatpush.msra.mxu0 0.0
    %2347 = vmatpush.msra.mxu0 0.0
    %2348 = vmatpush.msra.mxu0 0.0
    %2349 = vmatpush.msra.mxu0 0.0
    %2350 = vmatpush.msra.mxu0 0.0
    %2351 = vmatpush.msra.mxu0 0.0
    %2352 = vmatpush.msra.mxu0 0.0
    %2353 = vmatpush.msra.mxu0 0.0
    %2354 = vmatpush.msra.mxu0 0.0
    %v2355 = vand.u32 %v1393, 4294901760
    %v2356 = vsub.f32 %v1393, %v2355
    %2357 = vmatpush.msra.mxu0 %v2356
    %v2358 = vand.u32 %v1391, 4294901760
    %v2359 = vsub.f32 %v1391, %v2358
    %2360 = vmatpush.msra.mxu0 %v2359
    %v2361 = vand.u32 %v1389, 4294901760
    %v2362 = vsub.f32 %v1389, %v2361
    %2363 = vmatpush.msra.mxu0 %v2362
    %v2364 = vand.u32 %v1387, 4294901760
    %v2365 = vsub.f32 %v1387, %v2364
    %2366 = vmatpush.msra.mxu0 %v2365
    %v2367 = vand.u32 %v1396, 4294901760
    %v2368 = vsub.f32 %v1396, %v2367
    %2369 = vmatmul.f32.gmra.mxu0 %v2368
    %v2370 = vpop.f32.mrf.mxu0
    %v2371 = vadd.f32 %v2281, %v2370
    %v2372 = vand.u32 %v1399, 4294901760
    %v2373 = vsub.f32 %v1399, %v2372
    %2374 = vmatmul.f32.gmra.mxu0 %v2373
    %v2375 = vpop.f32.mrf.mxu0
    %v2376 = vadd.f32 %v2285, %v2375
    %v2377 = vand.u32 %v1402, 4294901760
    %v2378 = vsub.f32 %v1402, %v2377
    %2379 = vmatmul.f32.gmra.mxu0 %v2378
    %v2380 = vpop.f32.mrf.mxu0
    %v2381 = vadd.f32 %v2289, %v2380
    %v2382 = vand.u32 %v1405, 4294901760
    %v2383 = vsub.f32 %v1405, %v2382
    %2384 = vmatmul.f32.gmra.mxu0 %v2383
    %v2385 = vpop.f32.mrf.mxu0
    %v2386 = vadd.f32 %v2293, %v2385
    %v2387 = vand.u32 %v1408, 4294901760
    %v2388 = vsub.f32 %v1408, %v2387
    %2389 = vmatmul.f32.gmra.mxu0 %v2388
    %v2390 = vpop.f32.mrf.mxu0
    %v2391 = vadd.f32 %v2297, %v2390
    %v2392 = vand.u32 %v1411, 4294901760
    %v2393 = vsub.f32 %v1411, %v2392
    %2394 = vmatmul.f32.gmra.mxu0 %v2393
    %v2395 = vpop.f32.mrf.mxu0
    %v2396 = vadd.f32 %v2301, %v2395
    %v2397 = vand.u32 %v1414, 4294901760
    %v2398 = vsub.f32 %v1414, %v2397
    %2399 = vmatmul.f32.gmra.mxu0 %v2398
    %v2400 = vpop.f32.mrf.mxu0
    %v2401 = vadd.f32 %v2305, %v2400
    %v2402 = vand.u32 %v1417, 4294901760
    %v2403 = vsub.f32 %v1417, %v2402
    %2404 = vmatmul.f32.gmra.mxu0 %v2403
    %v2405 = vpop.f32.mrf.mxu0
    %v2406 = vadd.f32 %v2309, %v2405
    %v2407 = vand.u32 %v1420, 4294901760
    %v2408 = vsub.f32 %v1420, %v2407
    %2409 = vmatmul.f32.gmra.mxu0 %v2408
    %v2410 = vpop.f32.mrf.mxu0
    %v2411 = vadd.f32 %v2313, %v2410
    %v2412 = vand.u32 %v1423, 4294901760
    %v2413 = vsub.f32 %v1423, %v2412
    %2414 = vmatmul.f32.gmra.mxu0 %v2413
    %v2415 = vpop.f32.mrf.mxu0
    %v2416 = vadd.f32 %v2317, %v2415
    %v2417 = vand.u32 %v1426, 4294901760
    %v2418 = vsub.f32 %v1426, %v2417
    %2419 = vmatmul.f32.gmra.mxu0 %v2418
    %v2420 = vpop.f32.mrf.mxu0
    %v2421 = vadd.f32 %v2321, %v2420
    %v2422 = vand.u32 %v1429, 4294901760
    %v2423 = vsub.f32 %v1429, %v2422
    %2424 = vmatmul.f32.gmra.mxu0 %v2423
    %v2425 = vpop.f32.mrf.mxu0
    %v2426 = vadd.f32 %v2325, %v2425
    %v2427 = vand.u32 %v1432, 4294901760
    %v2428 = vsub.f32 %v1432, %v2427
    %2429 = vmatmul.f32.gmra.mxu0 %v2428
    %v2430 = vpop.f32.mrf.mxu0
    %v2431 = vadd.f32 %v2329, %v2430
    %v2432 = vand.u32 %v1435, 4294901760
    %v2433 = vsub.f32 %v1435, %v2432
    %2434 = vmatmul.f32.gmra.mxu0 %v2433
    %v2435 = vpop.f32.mrf.mxu0
    %v2436 = vadd.f32 %v2333, %v2435
    %v2437 = vand.u32 %v1438, 4294901760
    %v2438 = vsub.f32 %v1438, %v2437
    %2439 = vmatmul.f32.gmra.mxu0 %v2438
    %v2440 = vpop.f32.mrf.mxu0
    %v2441 = vadd.f32 %v2337, %v2440
    %v2442 = vand.u32 %v1441, 4294901760
    %v2443 = vsub.f32 %v1441, %v2442
    %2444 = vmatmul.f32.gmra.mxu0 %v2443
    %v2445 = vpop.f32.mrf.mxu0
    %v2446 = vadd.f32 %v2341, %v2445
    %2447 = vdwg.mxu0
    %2448 = vmatpush.msra.mxu0 0.0
    %2449 = vmatpush.msra.mxu0 0.0
    %2450 = vmatpush.msra.mxu0 0.0
    %2451 = vmatpush.msra.mxu0 0.0
    %2452 = vmatpush.msra.mxu0 0.0
    %2453 = vmatpush.msra.mxu0 0.0
    %2454 = vmatpush.msra.mxu0 0.0
    %2455 = vmatpush.msra.mxu0 0.0
    %2456 = vmatpush.msra.mxu0 0.0
    %2457 = vmatpush.msra.mxu0 0.0
    %2458 = vmatpush.msra.mxu0 0.0
    %2459 = vmatpush.msra.mxu0 0.0
    %v2460 = vand.u32 %v1393, 4294901760
    %2461 = vmatpush.msra.mxu0 %v2460
    %v2462 = vand.u32 %v1391, 4294901760
    %2463 = vmatpush.msra.mxu0 %v2462
    %v2464 = vand.u32 %v1389, 4294901760
    %2465 = vmatpush.msra.mxu0 %v2464
    %v2466 = vand.u32 %v1387, 4294901760
    %2467 = vmatpush.msra.mxu0 %v2466
    %v2468 = vand.u32 %v1396, 4294901760
    %v2469 = vsub.f32 %v1396, %v2468
    %v2470 = vand.u32 %v2469, 4294901760
    %2471 = vmatmul.f32.gmra.mxu0 %v2470
    %v2472 = vpop.f32.mrf.mxu0
    %v2473 = vadd.f32 %v2371, %v2472
    %v2474 = vand.u32 %v1399, 4294901760
    %v2475 = vsub.f32 %v1399, %v2474
    %v2476 = vand.u32 %v2475, 4294901760
    %2477 = vmatmul.f32.gmra.mxu0 %v2476
    %v2478 = vpop.f32.mrf.mxu0
    %v2479 = vadd.f32 %v2376, %v2478
    %v2480 = vand.u32 %v1402, 4294901760
    %v2481 = vsub.f32 %v1402, %v2480
    %v2482 = vand.u32 %v2481, 4294901760
    %2483 = vmatmul.f32.gmra.mxu0 %v2482
    %v2484 = vpop.f32.mrf.mxu0
    %v2485 = vadd.f32 %v2381, %v2484
    %v2486 = vand.u32 %v1405, 4294901760
    %v2487 = vsub.f32 %v1405, %v2486
    %v2488 = vand.u32 %v2487, 4294901760
    %2489 = vmatmul.f32.gmra.mxu0 %v2488
    %v2490 = vpop.f32.mrf.mxu0
    %v2491 = vadd.f32 %v2386, %v2490
    %v2492 = vand.u32 %v1408, 4294901760
    %v2493 = vsub.f32 %v1408, %v2492
    %v2494 = vand.u32 %v2493, 4294901760
    %2495 = vmatmul.f32.gmra.mxu0 %v2494
    %v2496 = vpop.f32.mrf.mxu0
    %v2497 = vadd.f32 %v2391, %v2496
    %v2498 = vand.u32 %v1411, 4294901760
    %v2499 = vsub.f32 %v1411, %v2498
    %v2500 = vand.u32 %v2499, 4294901760
    %2501 = vmatmul.f32.gmra.mxu0 %v2500
    %v2502 = vpop.f32.mrf.mxu0
    %v2503 = vadd.f32 %v2396, %v2502
    %v2504 = vand.u32 %v1414, 4294901760
    %v2505 = vsub.f32 %v1414, %v2504
    %v2506 = vand.u32 %v2505, 4294901760
    %2507 = vmatmul.f32.gmra.mxu0 %v2506
    %v2508 = vpop.f32.mrf.mxu0
    %v2509 = vadd.f32 %v2401, %v2508
    %v2510 = vand.u32 %v1417, 4294901760
    %v2511 = vsub.f32 %v1417, %v2510
    %v2512 = vand.u32 %v2511, 4294901760
    %2513 = vmatmul.f32.gmra.mxu0 %v2512
    %v2514 = vpop.f32.mrf.mxu0
    %v2515 = vadd.f32 %v2406, %v2514
    %v2516 = vand.u32 %v1420, 4294901760
    %v2517 = vsub.f32 %v1420, %v2516
    %v2518 = vand.u32 %v2517, 4294901760
    %2519 = vmatmul.f32.gmra.mxu0 %v2518
    %v2520 = vpop.f32.mrf.mxu0
    %v2521 = vadd.f32 %v2411, %v2520
    %v2522 = vand.u32 %v1423, 4294901760
    %v2523 = vsub.f32 %v1423, %v2522
    %v2524 = vand.u32 %v2523, 4294901760
    %2525 = vmatmul.f32.gmra.mxu0 %v2524
    %v2526 = vpop.f32.mrf.mxu0
    %v2527 = vadd.f32 %v2416, %v2526
    %v2528 = vand.u32 %v1426, 4294901760
    %v2529 = vsub.f32 %v1426, %v2528
    %v2530 = vand.u32 %v2529, 4294901760
    %2531 = vmatmul.f32.gmra.mxu0 %v2530
    %v2532 = vpop.f32.mrf.mxu0
    %v2533 = vadd.f32 %v2421, %v2532
    %v2534 = vand.u32 %v1429, 4294901760
    %v2535 = vsub.f32 %v1429, %v2534
    %v2536 = vand.u32 %v2535, 4294901760
    %2537 = vmatmul.f32.gmra.mxu0 %v2536
    %v2538 = vpop.f32.mrf.mxu0
    %v2539 = vadd.f32 %v2426, %v2538
    %v2540 = vand.u32 %v1432, 4294901760
    %v2541 = vsub.f32 %v1432, %v2540
    %v2542 = vand.u32 %v2541, 4294901760
    %2543 = vmatmul.f32.gmra.mxu0 %v2542
    %v2544 = vpop.f32.mrf.mxu0
    %v2545 = vadd.f32 %v2431, %v2544
    %v2546 = vand.u32 %v1435, 4294901760
    %v2547 = vsub.f32 %v1435, %v2546
    %v2548 = vand.u32 %v2547, 4294901760
    %2549 = vmatmul.f32.gmra.mxu0 %v2548
    %v2550 = vpop.f32.mrf.mxu0
    %v2551 = vadd.f32 %v2436, %v2550
    %v2552 = vand.u32 %v1438, 4294901760
    %v2553 = vsub.f32 %v1438, %v2552
    %v2554 = vand.u32 %v2553, 4294901760
    %2555 = vmatmul.f32.gmra.mxu0 %v2554
    %v2556 = vpop.f32.mrf.mxu0
    %v2557 = vadd.f32 %v2441, %v2556
    %v2558 = vand.u32 %v1441, 4294901760
    %v2559 = vsub.f32 %v1441, %v2558
    %v2560 = vand.u32 %v2559, 4294901760
    %2561 = vmatmul.f32.gmra.mxu0 %v2560
    %v2562 = vpop.f32.mrf.mxu0
    %v2563 = vadd.f32 %v2446, %v2562
    %2564 = vdwg.mxu0
    %2565 = vmatpush.msra.mxu0 0.0
    %2566 = vmatpush.msra.mxu0 0.0
    %2567 = vmatpush.msra.mxu0 0.0
    %2568 = vmatpush.msra.mxu0 0.0
    %2569 = vmatpush.msra.mxu0 0.0
    %2570 = vmatpush.msra.mxu0 0.0
    %2571 = vmatpush.msra.mxu0 0.0
    %2572 = vmatpush.msra.mxu0 0.0
    %2573 = vmatpush.msra.mxu0 0.0
    %2574 = vmatpush.msra.mxu0 0.0
    %2575 = vmatpush.msra.mxu0 0.0
    %2576 = vmatpush.msra.mxu0 0.0
    %v2577 = vand.u32 %v1393, 4294901760
    %v2578 = vsub.f32 %v1393, %v2577
    %v2579 = vand.u32 %v2578, 4294901760
    %2580 = vmatpush.msra.mxu0 %v2579
    %v2581 = vand.u32 %v1391, 4294901760
    %v2582 = vsub.f32 %v1391, %v2581
    %v2583 = vand.u32 %v2582, 4294901760
    %2584 = vmatpush.msra.mxu0 %v2583
    %v2585 = vand.u32 %v1389, 4294901760
    %v2586 = vsub.f32 %v1389, %v2585
    %v2587 = vand.u32 %v2586, 4294901760
    %2588 = vmatpush.msra.mxu0 %v2587
    %v2589 = vand.u32 %v1387, 4294901760
    %v2590 = vsub.f32 %v1387, %v2589
    %v2591 = vand.u32 %v2590, 4294901760
    %2592 = vmatpush.msra.mxu0 %v2591
    %v2593 = vand.u32 %v1396, 4294901760
    %2594 = vmatmul.f32.gmra.mxu0 %v2593
    %v2595 = vpop.f32.mrf.mxu0
    %v2596 = vadd.f32 %v2473, %v2595
    %v2597 = vand.u32 %v1399, 4294901760
    %2598 = vmatmul.f32.gmra.mxu0 %v2597
    %v2599 = vpop.f32.mrf.mxu0
    %v2600 = vadd.f32 %v2479, %v2599
    %v2601 = vand.u32 %v1402, 4294901760
    %2602 = vmatmul.f32.gmra.mxu0 %v2601
    %v2603 = vpop.f32.mrf.mxu0
    %v2604 = vadd.f32 %v2485, %v2603
    %v2605 = vand.u32 %v1405, 4294901760
    %2606 = vmatmul.f32.gmra.mxu0 %v2605
    %v2607 = vpop.f32.mrf.mxu0
    %v2608 = vadd.f32 %v2491, %v2607
    %v2609 = vand.u32 %v1408, 4294901760
    %2610 = vmatmul.f32.gmra.mxu0 %v2609
    %v2611 = vpop.f32.mrf.mxu0
    %v2612 = vadd.f32 %v2497, %v2611
    %v2613 = vand.u32 %v1411, 4294901760
    %2614 = vmatmul.f32.gmra.mxu0 %v2613
    %v2615 = vpop.f32.mrf.mxu0
    %v2616 = vadd.f32 %v2503, %v2615
    %v2617 = vand.u32 %v1414, 4294901760
    %2618 = vmatmul.f32.gmra.mxu0 %v2617
    %v2619 = vpop.f32.mrf.mxu0
    %v2620 = vadd.f32 %v2509, %v2619
    %v2621 = vand.u32 %v1417, 4294901760
    %2622 = vmatmul.f32.gmra.mxu0 %v2621
    %v2623 = vpop.f32.mrf.mxu0
    %v2624 = vadd.f32 %v2515, %v2623
    %v2625 = vand.u32 %v1420, 4294901760
    %2626 = vmatmul.f32.gmra.mxu0 %v2625
    %v2627 = vpop.f32.mrf.mxu0
    %v2628 = vadd.f32 %v2521, %v2627
    %v2629 = vand.u32 %v1423, 4294901760
    %2630 = vmatmul.f32.gmra.mxu0 %v2629
    %v2631 = vpop.f32.mrf.mxu0
    %v2632 = vadd.f32 %v2527, %v2631
    %v2633 = vand.u32 %v1426, 4294901760
    %2634 = vmatmul.f32.gmra.mxu0 %v2633
    %v2635 = vpop.f32.mrf.mxu0
    %v2636 = vadd.f32 %v2533, %v2635
    %v2637 = vand.u32 %v1429, 4294901760
    %2638 = vmatmul.f32.gmra.mxu0 %v2637
    %v2639 = vpop.f32.mrf.mxu0
    %v2640 = vadd.f32 %v2539, %v2639
    %v2641 = vand.u32 %v1432, 4294901760
    %2642 = vmatmul.f32.gmra.mxu0 %v2641
    %v2643 = vpop.f32.mrf.mxu0
    %v2644 = vadd.f32 %v2545, %v2643
    %v2645 = vand.u32 %v1435, 4294901760
    %2646 = vmatmul.f32.gmra.mxu0 %v2645
    %v2647 = vpop.f32.mrf.mxu0
    %v2648 = vadd.f32 %v2551, %v2647
    %v2649 = vand.u32 %v1438, 4294901760
    %2650 = vmatmul.f32.gmra.mxu0 %v2649
    %v2651 = vpop.f32.mrf.mxu0
    %v2652 = vadd.f32 %v2557, %v2651
    %v2653 = vand.u32 %v1441, 4294901760
    %2654 = vmatmul.f32.gmra.mxu0 %v2653
    %v2655 = vpop.f32.mrf.mxu0
    %v2656 = vadd.f32 %v2563, %v2655
    %2657 = vdwg.mxu0
    %2658 = vmatpush.msra.mxu0 0.0
    %2659 = vmatpush.msra.mxu0 0.0
    %2660 = vmatpush.msra.mxu0 0.0
    %2661 = vmatpush.msra.mxu0 0.0
    %2662 = vmatpush.msra.mxu0 0.0
    %2663 = vmatpush.msra.mxu0 0.0
    %2664 = vmatpush.msra.mxu0 0.0
    %2665 = vmatpush.msra.mxu0 0.0
    %2666 = vmatpush.msra.mxu0 0.0
    %2667 = vmatpush.msra.mxu0 0.0
    %2668 = vmatpush.msra.mxu0 0.0
    %2669 = vmatpush.msra.mxu0 0.0
    %v2670 = vand.u32 %v1393, 4294901760
    %2671 = vmatpush.msra.mxu0 %v2670
    %v2672 = vand.u32 %v1391, 4294901760
    %2673 = vmatpush.msra.mxu0 %v2672
    %v2674 = vand.u32 %v1389, 4294901760
    %2675 = vmatpush.msra.mxu0 %v2674
    %v2676 = vand.u32 %v1387, 4294901760
    %2677 = vmatpush.msra.mxu0 %v2676
    %v2678 = vand.u32 %v1396, 4294901760
    %2679 = vmatmul.f32.gmra.mxu0 %v2678
    %v2680 = vpop.f32.mrf.mxu0
    %v2681 = vadd.f32 %v2596, %v2680
    %v2682 = vand.u32 %v1399, 4294901760
    %2683 = vmatmul.f32.gmra.mxu0 %v2682
    %v2684 = vpop.f32.mrf.mxu0
    %v2685 = vadd.f32 %v2600, %v2684
    %v2686 = vand.u32 %v1402, 4294901760
    %2687 = vmatmul.f32.gmra.mxu0 %v2686
    %v2688 = vpop.f32.mrf.mxu0
    %v2689 = vadd.f32 %v2604, %v2688
    %v2690 = vand.u32 %v1405, 4294901760
    %2691 = vmatmul.f32.gmra.mxu0 %v2690
    %v2692 = vpop.f32.mrf.mxu0
    %v2693 = vadd.f32 %v2608, %v2692
    %v2694 = vand.u32 %v1408, 4294901760
    %2695 = vmatmul.f32.gmra.mxu0 %v2694
    %v2696 = vpop.f32.mrf.mxu0
    %v2697 = vadd.f32 %v2612, %v2696
    %v2698 = vand.u32 %v1411, 4294901760
    %2699 = vmatmul.f32.gmra.mxu0 %v2698
    %v2700 = vpop.f32.mrf.mxu0
    %v2701 = vadd.f32 %v2616, %v2700
    %v2702 = vand.u32 %v1414, 4294901760
    %2703 = vmatmul.f32.gmra.mxu0 %v2702
    %v2704 = vpop.f32.mrf.mxu0
    %v2705 = vadd.f32 %v2620, %v2704
    %v2706 = vand.u32 %v1417, 4294901760
    %2707 = vmatmul.f32.gmra.mxu0 %v2706
    %v2708 = vpop.f32.mrf.mxu0
    %v2709 = vadd.f32 %v2624, %v2708
    %v2710 = vand.u32 %v1420, 4294901760
    %2711 = vmatmul.f32.gmra.mxu0 %v2710
    %v2712 = vpop.f32.mrf.mxu0
    %v2713 = vadd.f32 %v2628, %v2712
    %v2714 = vand.u32 %v1423, 4294901760
    %2715 = vmatmul.f32.gmra.mxu0 %v2714
    %v2716 = vpop.f32.mrf.mxu0
    %v2717 = vadd.f32 %v2632, %v2716
    %v2718 = vand.u32 %v1426, 4294901760
    %2719 = vmatmul.f32.gmra.mxu0 %v2718
    %v2720 = vpop.f32.mrf.mxu0
    %v2721 = vadd.f32 %v2636, %v2720
    %v2722 = vand.u32 %v1429, 4294901760
    %2723 = vmatmul.f32.gmra.mxu0 %v2722
    %v2724 = vpop.f32.mrf.mxu0
    %v2725 = vadd.f32 %v2640, %v2724
    %v2726 = vand.u32 %v1432, 4294901760
    %2727 = vmatmul.f32.gmra.mxu0 %v2726
    %v2728 = vpop.f32.mrf.mxu0
    %v2729 = vadd.f32 %v2644, %v2728
    %v2730 = vand.u32 %v1435, 4294901760
    %2731 = vmatmul.f32.gmra.mxu0 %v2730
    %v2732 = vpop.f32.mrf.mxu0
    %v2733 = vadd.f32 %v2648, %v2732
    %v2734 = vand.u32 %v1438, 4294901760
    %2735 = vmatmul.f32.gmra.mxu0 %v2734
    %v2736 = vpop.f32.mrf.mxu0
    %v2737 = vadd.f32 %v2652, %v2736
    %v2738 = vand.u32 %v1441, 4294901760
    %2739 = vmatmul.f32.gmra.mxu0 %v2738
    %v2740 = vpop.f32.mrf.mxu0
    %v2741 = vadd.f32 %v2656, %v2740
    %2742 = vdwg.mxu0
    %v2743 = vmul.f32 %v676, %v2031
    %v2744 = vmul.f32 %v1300, %v2681
    %v2745 = vmul.f32 %v680, %v2035
    %v2746 = vmul.f32 %v1304, %v2685
    %v2747 = vmul.f32 %v684, %v2039
    %v2748 = vmul.f32 %v1308, %v2689
    %v2749 = vmul.f32 %v688, %v2043
    %v2750 = vmul.f32 %v1312, %v2693
    %v2751 = vmul.f32 %v692, %v2047
    %v2752 = vmul.f32 %v1316, %v2697
    %v2753 = vmul.f32 %v696, %v2051
    %v2754 = vmul.f32 %v1320, %v2701
    %v2755 = vmul.f32 %v700, %v2055
    %v2756 = vmul.f32 %v1324, %v2705
    %v2757 = vmul.f32 %v704, %v2059
    %v2758 = vmul.f32 %v1328, %v2709
    %v2759 = vmul.f32 %v708, %v2063
    %v2760 = vmul.f32 %v1332, %v2713
    %v2761 = vmul.f32 %v712, %v2067
    %v2762 = vmul.f32 %v1336, %v2717
    %v2763 = vmul.f32 %v716, %v2071
    %v2764 = vmul.f32 %v1340, %v2721
    %v2765 = vmul.f32 %v720, %v2075
    %v2766 = vmul.f32 %v1344, %v2725
    %v2767 = vmul.f32 %v724, %v2079
    %v2768 = vmul.f32 %v1348, %v2729
    %v2769 = vmul.f32 %v728, %v2083
    %v2770 = vmul.f32 %v1352, %v2733
    %v2771 = vmul.f32 %v732, %v2087
    %v2772 = vmul.f32 %v1356, %v2737
    %v2773 = vmul.f32 %v736, %v2091
    %v2774 = vmul.f32 %v1360, %v2741
    %v2775 = vadd.f32 %v2743, %v2745
    %v2776 = vadd.f32 %v2775, %v2747
    %v2777 = vadd.f32 %v2776, %v2749
    %v2778 = vadd.f32 %v2777, %v2751
    %v2779 = vadd.f32 %v2778, %v2753
    %v2780 = vadd.f32 %v2779, %v2755
    %v2781 = vadd.f32 %v2780, %v2757
    %v2782 = vadd.f32 %v2781, %v2759
    %v2783 = vadd.f32 %v2782, %v2761
    %v2784 = vadd.f32 %v2783, %v2763
    %v2785 = vadd.f32 %v2784, %v2765
    %v2786 = vadd.f32 %v2785, %v2767
    %v2787 = vadd.f32 %v2786, %v2769
    %v2788 = vadd.f32 %v2787, %v2771
    %v2789 = vadd.f32 %v2788, %v2773
    %v2790 = vrot.slane %v2789, 4
    %v2791 = vadd.f32 %v2789, %v2790
    %v2792 = vrot.slane %v2791, 2
    %v2793 = vadd.f32 %v2791, %v2792
    %v2794 = vrot.slane %v2793, 1
    %v2795 = vadd.f32 %v2793, %v2794
    %v2796 = vadd.f32 %v2744, %v2746
    %v2797 = vadd.f32 %v2796, %v2748
    %v2798 = vadd.f32 %v2797, %v2750
    %v2799 = vadd.f32 %v2798, %v2752
    %v2800 = vadd.f32 %v2799, %v2754
    %v2801 = vadd.f32 %v2800, %v2756
    %v2802 = vadd.f32 %v2801, %v2758
    %v2803 = vadd.f32 %v2802, %v2760
    %v2804 = vadd.f32 %v2803, %v2762
    %v2805 = vadd.f32 %v2804, %v2764
    %v2806 = vadd.f32 %v2805, %v2766
    %v2807 = vadd.f32 %v2806, %v2768
    %v2808 = vadd.f32 %v2807, %v2770
    %v2809 = vadd.f32 %v2808, %v2772
    %v2810 = vadd.f32 %v2809, %v2774
    %v2811 = vrot.slane %v2810, 4
    %v2812 = vadd.f32 %v2810, %v2811
    %v2813 = vrot.slane %v2812, 2
    %v2814 = vadd.f32 %v2812, %v2813
    %v2815 = vrot.slane %v2814, 1
    %v2816 = vadd.f32 %v2814, %v2815
    %v2819 = vrot.slane %v2816, 7
    %vm2820 = vcmask 1040384
    %v2821 = vsel %vm2820, %v2795, %v2819
    %v2823 = vlaneseq
    %vm2824 = vcmp.ge.s32.totalorder %v2823, 0
    %vm2825 = vcmp.lt.s32.totalorder %v2823, 256
    %vm2826 = vmand %vm2824, %vm2825
    %2827 = vst.msk [vmem:[#allocation2] sm:$0x3] %vm2826, %v2821
    // Predicated region
    $region18: #{tpu_custom_call.1} parent=1 // pred_check
      _
    $region19: #{tpu_custom_call.1} parent=1 // pred_check_branch
      %2829 = sbr.rel (0) target = $region21
    $region20: #{tpu_custom_call.1} parent=1 // pred_region
      %2831 = vsyncadd [#allocation3], 0
      %s2833 = sshll.u32 [#allocation2], 4
      %s2834 = int_to_ptr.vmem [resolvable:$true] %s2833
      %s2835 = sshll.u32 %s4, 4
      %s2836 = int_to_ptr.hbm [resolvable:$true] %s2835
      %2838 = dma.vmem_to_hbm [thread:$0]  %s2834, 32, %s2836, [#allocation3]
    $region21: #{tpu_custom_call.1} parent=1 // pred_fallthru
      _
    // Predicated region
    $region22: #{tpu_custom_call.1} parent=1 // pred_check
      _
    $region23: #{tpu_custom_call.1} parent=1 // pred_check_branch
      %2840 = sbr.rel (0) target = $region25
    $region24: #{tpu_custom_call.1} parent=1 // pred_region
      %2842 = dma.done [#allocation3], 32
    $region25: #{tpu_custom_call.1} parent=1 // pred_fallthru
      _
    %2843 = vsyncpa [#allocation3], 1

</llo_original>
